<compile_context>
chip_gen: v6e
topology: v6e:2x2x1
jax: 0.10.0
libtpu: 0.0.40
codegen_flags: <defaults>
</compile_context>

<pallas_src>
import functools

import jax
import jax.numpy as jnp
from jax.experimental import pallas as pl
from jax.experimental.pallas import tpu as pltpu  # noqa: F401  (kept for parity / future tiling)


def _gru_kernel(
    x_ref,        # (S*B, I)   all timesteps, flattened
    w_ih_ref,     # (I, 3H)    [W_ir | W_iz | W_in]  (pre-transposed)
    b_i_ref,      # (1, 3H)    [b_ir+b_hr | b_iz+b_hz | b_in]
    w_hh_ref,     # (H, 3H)    [W_hr | W_hz | W_hn]  (pre-transposed)
    b_hn_ref,     # (1, H)
    w_head_ref,   # (H, O)     folded linear1 @ linear2
    b_head_ref,   # (1, O)     folded b1 @ w2 + b2
    out_ref,      # (S*B, O)
    *, seq_len, batch, hidden,
):
    B, H = batch, hidden

    # ---- Hoisted input projection for ALL timesteps: one (S*B,I)x(I,3H) matmul.
    gx_all = (
        jnp.dot(x_ref[...], w_ih_ref[...], preferred_element_type=jnp.float32)
        + b_i_ref[...]
    )  # (S*B, 3H)

    w_hh = w_hh_ref[...]
    w_head = w_head_ref[...]
    b_head = b_head_ref[...]
    # Hoisted broadcast: keep broadcast_in_dim out of the unrolled loop.
    b_hn_b = jnp.broadcast_to(b_hn_ref[...], (B, H))

    # ---- Recurrence: fully unrolled static loop (S is small & static). h stays
    # in vregs; the only MXU work on the serial critical path is one
    # (B,H)x(H,3H) matmul per step.
    h = jnp.zeros((B, H), jnp.float32)
    for t in range(seq_len):
        lo, hi = t * B, (t + 1) * B
        gxt = gx_all[lo:hi, :]                                        # (B, 3H) sublane slice
        gh = jnp.dot(h, w_hh, preferred_element_type=jnp.float32)     # (B, 3H)
        # PyTorch GRU semantics (gate order r, z, n):
        #   r = sigmoid(W_ir x + b_ir + W_hr h + b_hr)
        #   z = sigmoid(W_iz x + b_iz + W_hz h + b_hz)
        #   n = tanh(W_in x + b_in + r * (W_hn h + b_hn))
        #   h = (1 - z) * n + z * h
        # Fused r/z sigmoid: one EUP issue for both gates (operand fits a vreg).
        rz = jax.nn.sigmoid(gxt[:, :2 * H] + gh[:, :2 * H])
        r = rz[:, :H]
        z = rz[:, H:]
        n = jnp.tanh(gxt[:, 2 * H:] + r * (gh[:, 2 * H:] + b_hn_b))
        # Algebraically identical to (1-z)*n + z*h, one fewer VPU op on the chain.
        h = n + z * (h - n)
        # Folded head applied per step (off the h->h dependency chain), stored
        # straight to the output: no h_all scratch, no readback.
        y = jnp.dot(h, w_head, preferred_element_type=jnp.float32) + b_head
        out_ref[lo:hi, :] = y.astype(out_ref.dtype)


def gru_rnn_forward(x, params):
    """x: (S, B, I) float32. params: dict of weights (see init_params)."""
    S, B, I = x.shape
    H = params["w_hh"].shape[0]
    O = params["w2"].shape[1]

    # Fold Linear(hidden,16) -> Linear(16,output): the module applies them
    # back-to-back with NO activation in between, so this is exact.
    w_head = params["w1"] @ params["w2"]                    # (H, O)
    b_head = params["b1"] @ params["w2"] + params["b2"]     # (1, O)

    x_flat = x.reshape(S * B, I)
    kernel = functools.partial(_gru_kernel, seq_len=S, batch=B, hidden=H)

    out_flat = pl.pallas_call(
        kernel,
        out_shape=jax.ShapeDtypeStruct((S * B, O), jnp.float32),
        # No grid: single invocation; all operands are full VMEM-resident blocks
        # (total footprint here is <100 KB, far under any generation's VMEM limit).
    )(
        x_flat,
        params["w_ih"], params["b_i"],
        params["w_hh"], params["b_hn"],
        w_head, b_head,
    )
    return out_flat.reshape(S, B, O)


def init_params(key, input_size, hidden_size, output_size):
    """Deterministic parameter init matching the shapes of
    nn.GRU(input_size, hidden_size, 1) + Linear(hidden,16) + Linear(16,output),
    pre-transposed and gate-concatenated for the kernel."""
    I, H, O = input_size, hidden_size, output_size
    ks = jax.random.split(key, 16)
    u = lambda k, shape, bound: jax.random.uniform(
        k, shape, jnp.float32, minval=-bound, maxval=bound)
    bh = 1.0 / jnp.sqrt(H)

    # PyTorch stores W_ih (3H, I) / W_hh (3H, H) with gate order (r, z, n);
    # we pre-transpose, concatenate per gate along the output axis, and pre-add
    # b_ir+b_hr and b_iz+b_hz (b_hn must stay separate: it sits inside r*(...)).
    wir, wiz, win = u(ks[0], (I, H), bh), u(ks[1], (I, H), bh), u(ks[2], (I, H), bh)
    whr, whz, whn = u(ks[3], (H, H), bh), u(ks[4], (H, H), bh), u(ks[5], (H, H), bh)
    b_ir, b_hr = u(ks[6], (1, H), bh), u(ks[7], (1, H), bh)
    b_iz, b_hz = u(ks[8], (1, H), bh), u(ks[9], (1, H), bh)
    b_in, b_hn = u(ks[10], (1, H), bh), u(ks[11], (1, H), bh)

    return {
        "w_ih": jnp.concatenate([wir, wiz, win], axis=1),                   # (I, 3H)
        "w_hh": jnp.concatenate([whr, whz, whn], axis=1),                   # (H, 3H)
        "b_i":  jnp.concatenate([b_ir + b_hr, b_iz + b_hz, b_in], axis=1),  # (1, 3H)
        "b_hn": b_hn,                                                       # (1, H)
        "w1":   u(ks[12], (H, 16), bh),
        "b1":   u(ks[13], (1, 16), bh),
        "w2":   u(ks[14], (16, O), 1.0 / 4.0),
        "b2":   u(ks[15], (1, O), 1.0 / 4.0),
    }


def _reference_forward(x, p):
    """Pure-JAX reference (per-timestep, per-gate, UNFOLDED head) matching
    PyTorch GruRNN.forward; validates both the GRU math and the head folding."""
    S, B, I = x.shape
    H = p["w_hh"].shape[0]
    wir, wiz, win = p["w_ih"][:, :H], p["w_ih"][:, H:2 * H], p["w_ih"][:, 2 * H:]
    whr, whz, whn = p["w_hh"][:, :H], p["w_hh"][:, H:2 * H], p["w_hh"][:, 2 * H:]
    br, bz, bn = p["b_i"][:, :H], p["b_i"][:, H:2 * H], p["b_i"][:, 2 * H:]
    h = jnp.zeros((B, H), jnp.float32)
    outs = []
    for t in range(S):
        xt = x[t]
        r = jax.nn.sigmoid(xt @ wir + h @ whr + br)
        z = jax.nn.sigmoid(xt @ wiz + h @ whz + bz)
        n = jnp.tanh(xt @ win + bn + r * (h @ whn + p["b_hn"]))
        h = (1.0 - z) * n + z * h
        y = (h @ p["w1"] + p["b1"]) @ p["w2"] + p["b2"]
        outs.append(y)
    return jnp.stack(outs, axis=0)


if __name__ == "__main__":
    # Small shapes consistent with the module's forward:
    # x: (seq=8, batch=2, input_size=4); hidden_size=32, output_size=1.
    S, B, I, H, O = 8, 2, 4, 32, 1

    key = jax.random.PRNGKey(0)
    k_x, k_p = jax.random.split(key)
    x = jax.random.normal(k_x, (S, B, I), jnp.float32)
    params = init_params(k_p, I, H, O)

    out = jax.block_until_ready(gru_rnn_forward(x, params))
    ref = _reference_forward(x, params)

    assert out.shape == (S, B, O), out.shape
    assert jnp.allclose(out, ref, atol=2e-5, rtol=1e-5), float(jnp.max(jnp.abs(out - ref)))
    print("KERNEL_OK")
</pallas_src>

<mosaic_0001>
module attributes {stable_mosaic.version = 11 : i64} {
  func.func @_gru_kernel(%arg0: memref<16x4xf32, #tpu.memory_space<vmem>>, %arg1: memref<4x96xf32, #tpu.memory_space<vmem>>, %arg2: memref<1x96xf32, #tpu.memory_space<vmem>>, %arg3: memref<32x96xf32, #tpu.memory_space<vmem>>, %arg4: memref<1x32xf32, #tpu.memory_space<vmem>>, %arg5: memref<32x1xf32, #tpu.memory_space<vmem>>, %arg6: memref<1x1xf32, #tpu.memory_space<vmem>>, %arg7: memref<16x1xf32, #tpu.memory_space<vmem>>) attributes {dimension_semantics = [], scalar_prefetch = 0 : i64, scratch_operands = 0 : i64, tpu.core_type = #tpu.core_type<tc>} {
    %c0 = arith.constant 0 : index
    %c0_0 = arith.constant 0 : index
    %0 = vector.load %arg0[%c0, %c0_0] : memref<16x4xf32, #tpu.memory_space<vmem>>, vector<16x4xf32>
    %c0_1 = arith.constant 0 : index
    %c0_2 = arith.constant 0 : index
    %1 = vector.load %arg1[%c0_1, %c0_2] : memref<4x96xf32, #tpu.memory_space<vmem>>, vector<4x96xf32>
    %cst = arith.constant dense<0.000000e+00> : vector<16x96xf32>
    %2 = tpu.matmul %0, %1, %cst {dimension_numbers = #tpu.dot_dimension_numbers<[1], [0], [0], [1], [0, 0, 1, 1], [], []>} : vector<16x4xf32>, vector<4x96xf32>, vector<16x96xf32> -> vector<16x96xf32>
    %c0_3 = arith.constant 0 : index
    %c0_4 = arith.constant 0 : index
    %3 = vector.load %arg2[%c0_3, %c0_4] : memref<1x96xf32, #tpu.memory_space<vmem>>, vector<1x96xf32>
    %4 = vector.broadcast %3 : vector<1x96xf32> to vector<16x96xf32>
    %5 = arith.addf %2, %4 : vector<16x96xf32>
    %c0_5 = arith.constant 0 : index
    %c0_6 = arith.constant 0 : index
    %6 = vector.load %arg3[%c0_5, %c0_6] : memref<32x96xf32, #tpu.memory_space<vmem>>, vector<32x96xf32>
    %c0_7 = arith.constant 0 : index
    %c0_8 = arith.constant 0 : index
    %7 = vector.load %arg5[%c0_7, %c0_8] : memref<32x1xf32, #tpu.memory_space<vmem>>, vector<32x1xf32>
    %c0_9 = arith.constant 0 : index
    %c0_10 = arith.constant 0 : index
    %8 = vector.load %arg6[%c0_9, %c0_10] : memref<1x1xf32, #tpu.memory_space<vmem>>, vector<1x1xf32>
    %c0_11 = arith.constant 0 : index
    %c0_12 = arith.constant 0 : index
    %9 = vector.load %arg4[%c0_11, %c0_12] : memref<1x32xf32, #tpu.memory_space<vmem>>, vector<1x32xf32>
    %10 = vector.shape_cast %9 : vector<1x32xf32> to vector<1x32xf32>
    %11 = vector.broadcast %10 : vector<1x32xf32> to vector<2x32xf32>
    %cst_13 = arith.constant 0.000000e+00 : f32
    %12 = vector.broadcast %cst_13 : f32 to vector<2x32xf32>
    %13 = vector.extract_strided_slice %5 {offsets = [0, 0], sizes = [2, 96], strides = [1, 1]} : vector<16x96xf32> to vector<2x96xf32>
    %cst_14 = arith.constant dense<0.000000e+00> : vector<2x96xf32>
    %14 = tpu.matmul %12, %6, %cst_14 {dimension_numbers = #tpu.dot_dimension_numbers<[1], [0], [0], [1], [0, 0, 1, 1], [], []>} : vector<2x32xf32>, vector<32x96xf32>, vector<2x96xf32> -> vector<2x96xf32>
    %15 = vector.extract_strided_slice %13 {offsets = [0, 0], sizes = [2, 64], strides = [1, 1]} : vector<2x96xf32> to vector<2x64xf32>
    %16 = vector.extract_strided_slice %14 {offsets = [0, 0], sizes = [2, 64], strides = [1, 1]} : vector<2x96xf32> to vector<2x64xf32>
    %17 = arith.addf %15, %16 : vector<2x64xf32>
    %18 = arith.negf %17 : vector<2x64xf32>
    %19 = math.exp %18 : vector<2x64xf32>
    %cst_15 = arith.constant 1.000000e+00 : f32
    %20 = vector.broadcast %cst_15 : f32 to vector<2x64xf32>
    %21 = arith.addf %20, %19 : vector<2x64xf32>
    %22 = arith.divf %20, %21 : vector<2x64xf32>
    %23 = vector.extract_strided_slice %22 {offsets = [0, 0], sizes = [2, 32], strides = [1, 1]} : vector<2x64xf32> to vector<2x32xf32>
    %24 = vector.extract_strided_slice %22 {offsets = [0, 32], sizes = [2, 32], strides = [1, 1]} : vector<2x64xf32> to vector<2x32xf32>
    %25 = vector.extract_strided_slice %13 {offsets = [0, 64], sizes = [2, 32], strides = [1, 1]} : vector<2x96xf32> to vector<2x32xf32>
    %26 = vector.extract_strided_slice %14 {offsets = [0, 64], sizes = [2, 32], strides = [1, 1]} : vector<2x96xf32> to vector<2x32xf32>
    %27 = arith.addf %26, %11 : vector<2x32xf32>
    %28 = arith.mulf %23, %27 : vector<2x32xf32>
    %29 = arith.addf %25, %28 : vector<2x32xf32>
    %30 = math.tanh %29 : vector<2x32xf32>
    %31 = arith.subf %12, %30 : vector<2x32xf32>
    %32 = arith.mulf %24, %31 : vector<2x32xf32>
    %33 = arith.addf %30, %32 : vector<2x32xf32>
    %cst_16 = arith.constant dense<0.000000e+00> : vector<2x1xf32>
    %34 = tpu.matmul %33, %7, %cst_16 {dimension_numbers = #tpu.dot_dimension_numbers<[1], [0], [0], [1], [0, 0, 1, 1], [], []>} : vector<2x32xf32>, vector<32x1xf32>, vector<2x1xf32> -> vector<2x1xf32>
    %35 = vector.broadcast %8 : vector<1x1xf32> to vector<2x1xf32>
    %36 = arith.addf %34, %35 : vector<2x1xf32>
    %c0_17 = arith.constant 0 : index
    %c0_18 = arith.constant 0 : index
    %37 = vector.load %arg7[%c0_17, %c0_18] : memref<16x1xf32, #tpu.memory_space<vmem>>, vector<2x1xf32>
    tpu.vector_store %arg7[%c0_17, %c0_18], %36 {strides = array<i32>} : memref<16x1xf32, #tpu.memory_space<vmem>>, vector<2x1xf32>,
    %38 = vector.extract_strided_slice %5 {offsets = [2, 0], sizes = [2, 96], strides = [1, 1]} : vector<16x96xf32> to vector<2x96xf32>
    %cst_19 = arith.constant dense<0.000000e+00> : vector<2x96xf32>
    %39 = tpu.matmul %33, %6, %cst_19 {dimension_numbers = #tpu.dot_dimension_numbers<[1], [0], [0], [1], [0, 0, 1, 1], [], []>} : vector<2x32xf32>, vector<32x96xf32>, vector<2x96xf32> -> vector<2x96xf32>
    %40 = vector.extract_strided_slice %38 {offsets = [0, 0], sizes = [2, 64], strides = [1, 1]} : vector<2x96xf32> to vector<2x64xf32>
    %41 = vector.extract_strided_slice %39 {offsets = [0, 0], sizes = [2, 64], strides = [1, 1]} : vector<2x96xf32> to vector<2x64xf32>
    %42 = arith.addf %40, %41 : vector<2x64xf32>
    %43 = arith.negf %42 : vector<2x64xf32>
    %44 = math.exp %43 : vector<2x64xf32>
    %cst_20 = arith.constant 1.000000e+00 : f32
    %45 = vector.broadcast %cst_20 : f32 to vector<2x64xf32>
    %46 = arith.addf %45, %44 : vector<2x64xf32>
    %47 = arith.divf %45, %46 : vector<2x64xf32>
    %48 = vector.extract_strided_slice %47 {offsets = [0, 0], sizes = [2, 32], strides = [1, 1]} : vector<2x64xf32> to vector<2x32xf32>
    %49 = vector.extract_strided_slice %47 {offsets = [0, 32], sizes = [2, 32], strides = [1, 1]} : vector<2x64xf32> to vector<2x32xf32>
    %50 = vector.extract_strided_slice %38 {offsets = [0, 64], sizes = [2, 32], strides = [1, 1]} : vector<2x96xf32> to vector<2x32xf32>
    %51 = vector.extract_strided_slice %39 {offsets = [0, 64], sizes = [2, 32], strides = [1, 1]} : vector<2x96xf32> to vector<2x32xf32>
    %52 = arith.addf %51, %11 : vector<2x32xf32>
    %53 = arith.mulf %48, %52 : vector<2x32xf32>
    %54 = arith.addf %50, %53 : vector<2x32xf32>
    %55 = math.tanh %54 : vector<2x32xf32>
    %56 = arith.subf %33, %55 : vector<2x32xf32>
    %57 = arith.mulf %49, %56 : vector<2x32xf32>
    %58 = arith.addf %55, %57 : vector<2x32xf32>
    %cst_21 = arith.constant dense<0.000000e+00> : vector<2x1xf32>
    %59 = tpu.matmul %58, %7, %cst_21 {dimension_numbers = #tpu.dot_dimension_numbers<[1], [0], [0], [1], [0, 0, 1, 1], [], []>} : vector<2x32xf32>, vector<32x1xf32>, vector<2x1xf32> -> vector<2x1xf32>
    %60 = vector.broadcast %8 : vector<1x1xf32> to vector<2x1xf32>
    %61 = arith.addf %59, %60 : vector<2x1xf32>
    %c2 = arith.constant 2 : index
    %c0_22 = arith.constant 0 : index
    %62 = vector.load %arg7[%c2, %c0_22] : memref<16x1xf32, #tpu.memory_space<vmem>>, vector<2x1xf32>
    tpu.vector_store %arg7[%c2, %c0_22], %61 {strides = array<i32>} : memref<16x1xf32, #tpu.memory_space<vmem>>, vector<2x1xf32>,
    %63 = vector.extract_strided_slice %5 {offsets = [4, 0], sizes = [2, 96], strides = [1, 1]} : vector<16x96xf32> to vector<2x96xf32>
    %cst_23 = arith.constant dense<0.000000e+00> : vector<2x96xf32>
    %64 = tpu.matmul %58, %6, %cst_23 {dimension_numbers = #tpu.dot_dimension_numbers<[1], [0], [0], [1], [0, 0, 1, 1], [], []>} : vector<2x32xf32>, vector<32x96xf32>, vector<2x96xf32> -> vector<2x96xf32>
    %65 = vector.extract_strided_slice %63 {offsets = [0, 0], sizes = [2, 64], strides = [1, 1]} : vector<2x96xf32> to vector<2x64xf32>
    %66 = vector.extract_strided_slice %64 {offsets = [0, 0], sizes = [2, 64], strides = [1, 1]} : vector<2x96xf32> to vector<2x64xf32>
    %67 = arith.addf %65, %66 : vector<2x64xf32>
    %68 = arith.negf %67 : vector<2x64xf32>
    %69 = math.exp %68 : vector<2x64xf32>
    %cst_24 = arith.constant 1.000000e+00 : f32
    %70 = vector.broadcast %cst_24 : f32 to vector<2x64xf32>
    %71 = arith.addf %70, %69 : vector<2x64xf32>
    %72 = arith.divf %70, %71 : vector<2x64xf32>
    %73 = vector.extract_strided_slice %72 {offsets = [0, 0], sizes = [2, 32], strides = [1, 1]} : vector<2x64xf32> to vector<2x32xf32>
    %74 = vector.extract_strided_slice %72 {offsets = [0, 32], sizes = [2, 32], strides = [1, 1]} : vector<2x64xf32> to vector<2x32xf32>
    %75 = vector.extract_strided_slice %63 {offsets = [0, 64], sizes = [2, 32], strides = [1, 1]} : vector<2x96xf32> to vector<2x32xf32>
    %76 = vector.extract_strided_slice %64 {offsets = [0, 64], sizes = [2, 32], strides = [1, 1]} : vector<2x96xf32> to vector<2x32xf32>
    %77 = arith.addf %76, %11 : vector<2x32xf32>
    %78 = arith.mulf %73, %77 : vector<2x32xf32>
    %79 = arith.addf %75, %78 : vector<2x32xf32>
    %80 = math.tanh %79 : vector<2x32xf32>
    %81 = arith.subf %58, %80 : vector<2x32xf32>
    %82 = arith.mulf %74, %81 : vector<2x32xf32>
    %83 = arith.addf %80, %82 : vector<2x32xf32>
    %cst_25 = arith.constant dense<0.000000e+00> : vector<2x1xf32>
    %84 = tpu.matmul %83, %7, %cst_25 {dimension_numbers = #tpu.dot_dimension_numbers<[1], [0], [0], [1], [0, 0, 1, 1], [], []>} : vector<2x32xf32>, vector<32x1xf32>, vector<2x1xf32> -> vector<2x1xf32>
    %85 = vector.broadcast %8 : vector<1x1xf32> to vector<2x1xf32>
    %86 = arith.addf %84, %85 : vector<2x1xf32>
    %c4 = arith.constant 4 : index
    %c0_26 = arith.constant 0 : index
    %87 = vector.load %arg7[%c4, %c0_26] : memref<16x1xf32, #tpu.memory_space<vmem>>, vector<2x1xf32>
    tpu.vector_store %arg7[%c4, %c0_26], %86 {strides = array<i32>} : memref<16x1xf32, #tpu.memory_space<vmem>>, vector<2x1xf32>,
    %88 = vector.extract_strided_slice %5 {offsets = [6, 0], sizes = [2, 96], strides = [1, 1]} : vector<16x96xf32> to vector<2x96xf32>
    %cst_27 = arith.constant dense<0.000000e+00> : vector<2x96xf32>
    %89 = tpu.matmul %83, %6, %cst_27 {dimension_numbers = #tpu.dot_dimension_numbers<[1], [0], [0], [1], [0, 0, 1, 1], [], []>} : vector<2x32xf32>, vector<32x96xf32>, vector<2x96xf32> -> vector<2x96xf32>
    %90 = vector.extract_strided_slice %88 {offsets = [0, 0], sizes = [2, 64], strides = [1, 1]} : vector<2x96xf32> to vector<2x64xf32>
    %91 = vector.extract_strided_slice %89 {offsets = [0, 0], sizes = [2, 64], strides = [1, 1]} : vector<2x96xf32> to vector<2x64xf32>
    %92 = arith.addf %90, %91 : vector<2x64xf32>
    %93 = arith.negf %92 : vector<2x64xf32>
    %94 = math.exp %93 : vector<2x64xf32>
    %cst_28 = arith.constant 1.000000e+00 : f32
    %95 = vector.broadcast %cst_28 : f32 to vector<2x64xf32>
    %96 = arith.addf %95, %94 : vector<2x64xf32>
    %97 = arith.divf %95, %96 : vector<2x64xf32>
    %98 = vector.extract_strided_slice %97 {offsets = [0, 0], sizes = [2, 32], strides = [1, 1]} : vector<2x64xf32> to vector<2x32xf32>
    %99 = vector.extract_strided_slice %97 {offsets = [0, 32], sizes = [2, 32], strides = [1, 1]} : vector<2x64xf32> to vector<2x32xf32>
    %100 = vector.extract_strided_slice %88 {offsets = [0, 64], sizes = [2, 32], strides = [1, 1]} : vector<2x96xf32> to vector<2x32xf32>
    %101 = vector.extract_strided_slice %89 {offsets = [0, 64], sizes = [2, 32], strides = [1, 1]} : vector<2x96xf32> to vector<2x32xf32>
    %102 = arith.addf %101, %11 : vector<2x32xf32>
    %103 = arith.mulf %98, %102 : vector<2x32xf32>
    %104 = arith.addf %100, %103 : vector<2x32xf32>
    %105 = math.tanh %104 : vector<2x32xf32>
    %106 = arith.subf %83, %105 : vector<2x32xf32>
    %107 = arith.mulf %99, %106 : vector<2x32xf32>
    %108 = arith.addf %105, %107 : vector<2x32xf32>
    %cst_29 = arith.constant dense<0.000000e+00> : vector<2x1xf32>
    %109 = tpu.matmul %108, %7, %cst_29 {dimension_numbers = #tpu.dot_dimension_numbers<[1], [0], [0], [1], [0, 0, 1, 1], [], []>} : vector<2x32xf32>, vector<32x1xf32>, vector<2x1xf32> -> vector<2x1xf32>
    %110 = vector.broadcast %8 : vector<1x1xf32> to vector<2x1xf32>
    %111 = arith.addf %109, %110 : vector<2x1xf32>
    %c6 = arith.constant 6 : index
    %c0_30 = arith.constant 0 : index
    %112 = vector.load %arg7[%c6, %c0_30] : memref<16x1xf32, #tpu.memory_space<vmem>>, vector<2x1xf32>
    tpu.vector_store %arg7[%c6, %c0_30], %111 {strides = array<i32>} : memref<16x1xf32, #tpu.memory_space<vmem>>, vector<2x1xf32>,
    %113 = vector.extract_strided_slice %5 {offsets = [8, 0], sizes = [2, 96], strides = [1, 1]} : vector<16x96xf32> to vector<2x96xf32>
    %cst_31 = arith.constant dense<0.000000e+00> : vector<2x96xf32>
    %114 = tpu.matmul %108, %6, %cst_31 {dimension_numbers = #tpu.dot_dimension_numbers<[1], [0], [0], [1], [0, 0, 1, 1], [], []>} : vector<2x32xf32>, vector<32x96xf32>, vector<2x96xf32> -> vector<2x96xf32>
    %115 = vector.extract_strided_slice %113 {offsets = [0, 0], sizes = [2, 64], strides = [1, 1]} : vector<2x96xf32> to vector<2x64xf32>
    %116 = vector.extract_strided_slice %114 {offsets = [0, 0], sizes = [2, 64], strides = [1, 1]} : vector<2x96xf32> to vector<2x64xf32>
    %117 = arith.addf %115, %116 : vector<2x64xf32>
    %118 = arith.negf %117 : vector<2x64xf32>
    %119 = math.exp %118 : vector<2x64xf32>
    %cst_32 = arith.constant 1.000000e+00 : f32
    %120 = vector.broadcast %cst_32 : f32 to vector<2x64xf32>
    %121 = arith.addf %120, %119 : vector<2x64xf32>
    %122 = arith.divf %120, %121 : vector<2x64xf32>
    %123 = vector.extract_strided_slice %122 {offsets = [0, 0], sizes = [2, 32], strides = [1, 1]} : vector<2x64xf32> to vector<2x32xf32>
    %124 = vector.extract_strided_slice %122 {offsets = [0, 32], sizes = [2, 32], strides = [1, 1]} : vector<2x64xf32> to vector<2x32xf32>
    %125 = vector.extract_strided_slice %113 {offsets = [0, 64], sizes = [2, 32], strides = [1, 1]} : vector<2x96xf32> to vector<2x32xf32>
    %126 = vector.extract_strided_slice %114 {offsets = [0, 64], sizes = [2, 32], strides = [1, 1]} : vector<2x96xf32> to vector<2x32xf32>
    %127 = arith.addf %126, %11 : vector<2x32xf32>
    %128 = arith.mulf %123, %127 : vector<2x32xf32>
    %129 = arith.addf %125, %128 : vector<2x32xf32>
    %130 = math.tanh %129 : vector<2x32xf32>
    %131 = arith.subf %108, %130 : vector<2x32xf32>
    %132 = arith.mulf %124, %131 : vector<2x32xf32>
    %133 = arith.addf %130, %132 : vector<2x32xf32>
    %cst_33 = arith.constant dense<0.000000e+00> : vector<2x1xf32>
    %134 = tpu.matmul %133, %7, %cst_33 {dimension_numbers = #tpu.dot_dimension_numbers<[1], [0], [0], [1], [0, 0, 1, 1], [], []>} : vector<2x32xf32>, vector<32x1xf32>, vector<2x1xf32> -> vector<2x1xf32>
    %135 = vector.broadcast %8 : vector<1x1xf32> to vector<2x1xf32>
    %136 = arith.addf %134, %135 : vector<2x1xf32>
    %c8 = arith.constant 8 : index
    %c0_34 = arith.constant 0 : index
    %137 = vector.load %arg7[%c8, %c0_34] : memref<16x1xf32, #tpu.memory_space<vmem>>, vector<2x1xf32>
    tpu.vector_store %arg7[%c8, %c0_34], %136 {strides = array<i32>} : memref<16x1xf32, #tpu.memory_space<vmem>>, vector<2x1xf32>,
    %138 = vector.extract_strided_slice %5 {offsets = [10, 0], sizes = [2, 96], strides = [1, 1]} : vector<16x96xf32> to vector<2x96xf32>
    %cst_35 = arith.constant dense<0.000000e+00> : vector<2x96xf32>
    %139 = tpu.matmul %133, %6, %cst_35 {dimension_numbers = #tpu.dot_dimension_numbers<[1], [0], [0], [1], [0, 0, 1, 1], [], []>} : vector<2x32xf32>, vector<32x96xf32>, vector<2x96xf32> -> vector<2x96xf32>
    %140 = vector.extract_strided_slice %138 {offsets = [0, 0], sizes = [2, 64], strides = [1, 1]} : vector<2x96xf32> to vector<2x64xf32>
    %141 = vector.extract_strided_slice %139 {offsets = [0, 0], sizes = [2, 64], strides = [1, 1]} : vector<2x96xf32> to vector<2x64xf32>
    %142 = arith.addf %140, %141 : vector<2x64xf32>
    %143 = arith.negf %142 : vector<2x64xf32>
    %144 = math.exp %143 : vector<2x64xf32>
    %cst_36 = arith.constant 1.000000e+00 : f32
    %145 = vector.broadcast %cst_36 : f32 to vector<2x64xf32>
    %146 = arith.addf %145, %144 : vector<2x64xf32>
    %147 = arith.divf %145, %146 : vector<2x64xf32>
    %148 = vector.extract_strided_slice %147 {offsets = [0, 0], sizes = [2, 32], strides = [1, 1]} : vector<2x64xf32> to vector<2x32xf32>
    %149 = vector.extract_strided_slice %147 {offsets = [0, 32], sizes = [2, 32], strides = [1, 1]} : vector<2x64xf32> to vector<2x32xf32>
    %150 = vector.extract_strided_slice %138 {offsets = [0, 64], sizes = [2, 32], strides = [1, 1]} : vector<2x96xf32> to vector<2x32xf32>
    %151 = vector.extract_strided_slice %139 {offsets = [0, 64], sizes = [2, 32], strides = [1, 1]} : vector<2x96xf32> to vector<2x32xf32>
    %152 = arith.addf %151, %11 : vector<2x32xf32>
    %153 = arith.mulf %148, %152 : vector<2x32xf32>
    %154 = arith.addf %150, %153 : vector<2x32xf32>
    %155 = math.tanh %154 : vector<2x32xf32>
    %156 = arith.subf %133, %155 : vector<2x32xf32>
    %157 = arith.mulf %149, %156 : vector<2x32xf32>
    %158 = arith.addf %155, %157 : vector<2x32xf32>
    %cst_37 = arith.constant dense<0.000000e+00> : vector<2x1xf32>
    %159 = tpu.matmul %158, %7, %cst_37 {dimension_numbers = #tpu.dot_dimension_numbers<[1], [0], [0], [1], [0, 0, 1, 1], [], []>} : vector<2x32xf32>, vector<32x1xf32>, vector<2x1xf32> -> vector<2x1xf32>
    %160 = vector.broadcast %8 : vector<1x1xf32> to vector<2x1xf32>
    %161 = arith.addf %159, %160 : vector<2x1xf32>
    %c10 = arith.constant 10 : index
    %c0_38 = arith.constant 0 : index
    %162 = vector.load %arg7[%c10, %c0_38] : memref<16x1xf32, #tpu.memory_space<vmem>>, vector<2x1xf32>
    tpu.vector_store %arg7[%c10, %c0_38], %161 {strides = array<i32>} : memref<16x1xf32, #tpu.memory_space<vmem>>, vector<2x1xf32>,
    %163 = vector.extract_strided_slice %5 {offsets = [12, 0], sizes = [2, 96], strides = [1, 1]} : vector<16x96xf32> to vector<2x96xf32>
    %cst_39 = arith.constant dense<0.000000e+00> : vector<2x96xf32>
    %164 = tpu.matmul %158, %6, %cst_39 {dimension_numbers = #tpu.dot_dimension_numbers<[1], [0], [0], [1], [0, 0, 1, 1], [], []>} : vector<2x32xf32>, vector<32x96xf32>, vector<2x96xf32> -> vector<2x96xf32>
    %165 = vector.extract_strided_slice %163 {offsets = [0, 0], sizes = [2, 64], strides = [1, 1]} : vector<2x96xf32> to vector<2x64xf32>
    %166 = vector.extract_strided_slice %164 {offsets = [0, 0], sizes = [2, 64], strides = [1, 1]} : vector<2x96xf32> to vector<2x64xf32>
    %167 = arith.addf %165, %166 : vector<2x64xf32>
    %168 = arith.negf %167 : vector<2x64xf32>
    %169 = math.exp %168 : vector<2x64xf32>
    %cst_40 = arith.constant 1.000000e+00 : f32
    %170 = vector.broadcast %cst_40 : f32 to vector<2x64xf32>
    %171 = arith.addf %170, %169 : vector<2x64xf32>
    %172 = arith.divf %170, %171 : vector<2x64xf32>
    %173 = vector.extract_strided_slice %172 {offsets = [0, 0], sizes = [2, 32], strides = [1, 1]} : vector<2x64xf32> to vector<2x32xf32>
    %174 = vector.extract_strided_slice %172 {offsets = [0, 32], sizes = [2, 32], strides = [1, 1]} : vector<2x64xf32> to vector<2x32xf32>
    %175 = vector.extract_strided_slice %163 {offsets = [0, 64], sizes = [2, 32], strides = [1, 1]} : vector<2x96xf32> to vector<2x32xf32>
    %176 = vector.extract_strided_slice %164 {offsets = [0, 64], sizes = [2, 32], strides = [1, 1]} : vector<2x96xf32> to vector<2x32xf32>
    %177 = arith.addf %176, %11 : vector<2x32xf32>
    %178 = arith.mulf %173, %177 : vector<2x32xf32>
    %179 = arith.addf %175, %178 : vector<2x32xf32>
    %180 = math.tanh %179 : vector<2x32xf32>
    %181 = arith.subf %158, %180 : vector<2x32xf32>
    %182 = arith.mulf %174, %181 : vector<2x32xf32>
    %183 = arith.addf %180, %182 : vector<2x32xf32>
    %cst_41 = arith.constant dense<0.000000e+00> : vector<2x1xf32>
    %184 = tpu.matmul %183, %7, %cst_41 {dimension_numbers = #tpu.dot_dimension_numbers<[1], [0], [0], [1], [0, 0, 1, 1], [], []>} : vector<2x32xf32>, vector<32x1xf32>, vector<2x1xf32> -> vector<2x1xf32>
    %185 = vector.broadcast %8 : vector<1x1xf32> to vector<2x1xf32>
    %186 = arith.addf %184, %185 : vector<2x1xf32>
    %c12 = arith.constant 12 : index
    %c0_42 = arith.constant 0 : index
    %187 = vector.load %arg7[%c12, %c0_42] : memref<16x1xf32, #tpu.memory_space<vmem>>, vector<2x1xf32>
    tpu.vector_store %arg7[%c12, %c0_42], %186 {strides = array<i32>} : memref<16x1xf32, #tpu.memory_space<vmem>>, vector<2x1xf32>,
    %188 = vector.extract_strided_slice %5 {offsets = [14, 0], sizes = [2, 96], strides = [1, 1]} : vector<16x96xf32> to vector<2x96xf32>
    %cst_43 = arith.constant dense<0.000000e+00> : vector<2x96xf32>
    %189 = tpu.matmul %183, %6, %cst_43 {dimension_numbers = #tpu.dot_dimension_numbers<[1], [0], [0], [1], [0, 0, 1, 1], [], []>} : vector<2x32xf32>, vector<32x96xf32>, vector<2x96xf32> -> vector<2x96xf32>
    %190 = vector.extract_strided_slice %188 {offsets = [0, 0], sizes = [2, 64], strides = [1, 1]} : vector<2x96xf32> to vector<2x64xf32>
    %191 = vector.extract_strided_slice %189 {offsets = [0, 0], sizes = [2, 64], strides = [1, 1]} : vector<2x96xf32> to vector<2x64xf32>
    %192 = arith.addf %190, %191 : vector<2x64xf32>
    %193 = arith.negf %192 : vector<2x64xf32>
    %194 = math.exp %193 : vector<2x64xf32>
    %cst_44 = arith.constant 1.000000e+00 : f32
    %195 = vector.broadcast %cst_44 : f32 to vector<2x64xf32>
    %196 = arith.addf %195, %194 : vector<2x64xf32>
    %197 = arith.divf %195, %196 : vector<2x64xf32>
    %198 = vector.extract_strided_slice %197 {offsets = [0, 0], sizes = [2, 32], strides = [1, 1]} : vector<2x64xf32> to vector<2x32xf32>
    %199 = vector.extract_strided_slice %197 {offsets = [0, 32], sizes = [2, 32], strides = [1, 1]} : vector<2x64xf32> to vector<2x32xf32>
    %200 = vector.extract_strided_slice %188 {offsets = [0, 64], sizes = [2, 32], strides = [1, 1]} : vector<2x96xf32> to vector<2x32xf32>
    %201 = vector.extract_strided_slice %189 {offsets = [0, 64], sizes = [2, 32], strides = [1, 1]} : vector<2x96xf32> to vector<2x32xf32>
    %202 = arith.addf %201, %11 : vector<2x32xf32>
    %203 = arith.mulf %198, %202 : vector<2x32xf32>
    %204 = arith.addf %200, %203 : vector<2x32xf32>
    %205 = math.tanh %204 : vector<2x32xf32>
    %206 = arith.subf %183, %205 : vector<2x32xf32>
    %207 = arith.mulf %199, %206 : vector<2x32xf32>
    %208 = arith.addf %205, %207 : vector<2x32xf32>
    %cst_45 = arith.constant dense<0.000000e+00> : vector<2x1xf32>
    %209 = tpu.matmul %208, %7, %cst_45 {dimension_numbers = #tpu.dot_dimension_numbers<[1], [0], [0], [1], [0, 0, 1, 1], [], []>} : vector<2x32xf32>, vector<32x1xf32>, vector<2x1xf32> -> vector<2x1xf32>
    %210 = vector.broadcast %8 : vector<1x1xf32> to vector<2x1xf32>
    %211 = arith.addf %209, %210 : vector<2x1xf32>
    %c14 = arith.constant 14 : index
    %c0_46 = arith.constant 0 : index
    %212 = vector.load %arg7[%c14, %c0_46] : memref<16x1xf32, #tpu.memory_space<vmem>>, vector<2x1xf32>
    tpu.vector_store %arg7[%c14, %c0_46], %211 {strides = array<i32>} : memref<16x1xf32, #tpu.memory_space<vmem>>, vector<2x1xf32>,
    return
  }
}

</mosaic_0001>

<llo_original>
// kernel: tpu_custom_call.1
$region0: #{tpu_custom_call.1}
  #allocation0 [shape = 'u32[]', space=smem, size = 0x4, offset = 0x4, fixed_abs, tag = 'smem constant byte address 0x4 - core index']
  #allocation1 [shape = 'u32[144,128]{1,0:T(1,128)}', space=vmem, size = 0x12000, scoped, tag = 'internal scratch']
  #allocation2 [shape = 'f32[1,1]{1,0:T(1,128)S(1)}', space=vmem, size = 0x200, scoped, tag = 'scoped memory for tpu_custom_call.1']
  %s0 = inlined_call_operand.vmem [shape: f32[16,4], index: 0, kind: input, shape index: {}]
  %s1 = inlined_call_operand.vmem [shape: f32[4,96], index: 1, kind: input, shape index: {}]
  %s2 = inlined_call_operand.vmem [shape: f32[1,96], index: 2, kind: input, shape index: {}]
  %s3 = inlined_call_operand.vmem [shape: f32[32,96], index: 3, kind: input, shape index: {}]
  %s4 = inlined_call_operand.vmem [shape: f32[1,32], index: 4, kind: input, shape index: {}]
  %s5 = inlined_call_operand.vmem [shape: f32[32,1], index: 5, kind: input, shape index: {}]
  %s6 = inlined_call_operand.<no memory space> [shape: f32[1,1], index: 6, kind: input, shape index: {}]
  %s7 = inlined_call_operand.vmem [shape: f32[16,1], index: 7, kind: output, shape index: {}]
  %s8 = sld [smem:[#allocation0]]
  $region38: #{tpu_custom_call.1} parent=0
    _
  %s10 = ssub.s32 1, %s8
  %s11 = scalar_select 0, %s10, %s8
  %v12 = vstv %s6
  %13 = vst [vmem:[#allocation2] sm:$0x1] %v12
  // Predicated region
  $region2: #{tpu_custom_call.1} parent=0 // pred_check
    _
  $region3: #{tpu_custom_call.1} parent=0 // pred_check_branch
    %15 = sbr.rel (0) target = $region5
  $region4: #{tpu_custom_call.1} parent=0 // pred_region
    _
  $region5: #{tpu_custom_call.1} parent=0 // pred_fallthru
    _
  // Predicated region
  $region6: #{tpu_custom_call.1} parent=0 // pred_check
    _
  $region7: #{tpu_custom_call.1} parent=0 // pred_check_branch
    %17 = sbr.rel (0) target = $region9
  $region8: #{tpu_custom_call.1} parent=0 // pred_region
    _
  $region9: #{tpu_custom_call.1} parent=0 // pred_fallthru
    _
  // Predicated region
  $region10: #{tpu_custom_call.1} parent=0 // pred_check
    _
  $region11: #{tpu_custom_call.1} parent=0 // pred_check_branch
    %19 = sbr.rel (0) target = $region13
  $region12: #{tpu_custom_call.1} parent=0 // pred_region
    _
  $region13: #{tpu_custom_call.1} parent=0 // pred_fallthru
    _
  // Predicated region
  $region14: #{tpu_custom_call.1} parent=0 // pred_check
    _
  $region15: #{tpu_custom_call.1} parent=0 // pred_check_branch
    %21 = sbr.rel (0) target = $region17
  $region16: #{tpu_custom_call.1} parent=0 // pred_region
    _
  $region17: #{tpu_custom_call.1} parent=0 // pred_fallthru
    _
  // Predicated region
  $region18: #{tpu_custom_call.1} parent=0 // pred_check
    _
  $region19: #{tpu_custom_call.1} parent=0 // pred_check_branch
    %23 = sbr.rel (0) target = $region21
  $region20: #{tpu_custom_call.1} parent=0 // pred_region
    _
  $region21: #{tpu_custom_call.1} parent=0 // pred_fallthru
    _
  // Predicated region
  $region22: #{tpu_custom_call.1} parent=0 // pred_check
    _
  $region23: #{tpu_custom_call.1} parent=0 // pred_check_branch
    %25 = sbr.rel (0) target = $region25
  $region24: #{tpu_custom_call.1} parent=0 // pred_region
    _
  $region25: #{tpu_custom_call.1} parent=0 // pred_fallthru
    _
  // Predicated region
  $region26: #{tpu_custom_call.1} parent=0 // pred_check
    _
  $region27: #{tpu_custom_call.1} parent=0 // pred_check_branch
    %27 = sbr.rel (0) target = $region29
  $region28: #{tpu_custom_call.1} parent=0 // pred_region
    _
  $region29: #{tpu_custom_call.1} parent=0 // pred_fallthru
    _
  %v28 = vld [vmem:[%s0] sm:$0xff]
  %v29 = vld [vmem:[%s0 + $0x8] sm:$0xff]
  %v30 = vld [vmem:[%s1] sm:$0xf]
  %v31 = vld [vmem:[%s2] sm:$0x1]
  %v33 = vlaneseq
  %v34 = vshrl.u32 %v33, 7
  %v35 = vsub.s32 0, %v34
  %v36 = vrot.slane %v31, %v35
  %vm38 = vcmask 31744
  %v40 = vsel %vm38, %v28, 0
  %v43 = vsel %vm38, %v29, 0
  %vm45 = vcmask 1043456
  %v47 = vsel %vm45, %v30, 0
  %49 = vmatprep.subr.mxu0 0.0
  %50 = vmatpush1.msra.mxu0 0.0
  %51 = vmatprep.subr.mxu0 0.0
  %52 = vmatpush1.msra.mxu0 0.0
  %53 = vmatprep.subr.mxu0 0.0
  %54 = vmatpush1.msra.mxu0 0.0
  %55 = vmatprep.subr.mxu0 0.0
  %56 = vmatpush1.msra.mxu0 0.0
  %57 = vmatprep.subr.mxu0 0.0
  %58 = vmatpush1.msra.mxu0 0.0
  %59 = vmatprep.subr.mxu0 0.0
  %60 = vmatpush1.msra.mxu0 0.0
  %61 = vmatprep.subr.mxu0 0.0
  %62 = vmatpush1.msra.mxu0 0.0
  %63 = vmatprep.subr.mxu0 0.0
  %64 = vmatpush1.msra.mxu0 0.0
  %65 = vmatprep.subr.mxu0 0.0
  %66 = vmatpush1.msra.mxu0 0.0
  %67 = vmatprep.subr.mxu0 0.0
  %68 = vmatpush1.msra.mxu0 0.0
  %69 = vmatprep.subr.mxu0 0.0
  %70 = vmatpush1.msra.mxu0 0.0
  %71 = vmatprep.subr.mxu0 0.0
  %72 = vmatpush1.msra.mxu0 0.0
  %73 = vmatprep.subr.mxu0 0.0
  %74 = vmatpush1.msra.mxu0 0.0
  %75 = vmatprep.subr.mxu0 0.0
  %76 = vmatpush1.msra.mxu0 0.0
  %77 = vmatprep.subr.mxu0 0.0
  %78 = vmatpush1.msra.mxu0 0.0
  %79 = vmatprep.subr.mxu0 0.0
  %80 = vmatpush1.msra.mxu0 %v47
  %81 = vmatprep.subr.mxu0 0.0
  %82 = vmatpush2.msra.mxu0 0.0
  %83 = vmatprep.subr.mxu0 0.0
  %84 = vmatpush2.msra.mxu0 0.0
  %85 = vmatprep.subr.mxu0 0.0
  %86 = vmatpush2.msra.mxu0 0.0
  %87 = vmatprep.subr.mxu0 0.0
  %88 = vmatpush2.msra.mxu0 0.0
  %89 = vmatprep.subr.mxu0 0.0
  %90 = vmatpush2.msra.mxu0 0.0
  %91 = vmatprep.subr.mxu0 0.0
  %92 = vmatpush2.msra.mxu0 0.0
  %93 = vmatprep.subr.mxu0 0.0
  %94 = vmatpush2.msra.mxu0 0.0
  %95 = vmatprep.subr.mxu0 0.0
  %96 = vmatpush2.msra.mxu0 0.0
  %97 = vmatprep.subr.mxu0 0.0
  %98 = vmatpush2.msra.mxu0 0.0
  %99 = vmatprep.subr.mxu0 0.0
  %100 = vmatpush2.msra.mxu0 0.0
  %101 = vmatprep.subr.mxu0 0.0
  %102 = vmatpush2.msra.mxu0 0.0
  %103 = vmatprep.subr.mxu0 0.0
  %104 = vmatpush2.msra.mxu0 0.0
  %105 = vmatprep.subr.mxu0 0.0
  %106 = vmatpush2.msra.mxu0 0.0
  %107 = vmatprep.subr.mxu0 0.0
  %108 = vmatpush2.msra.mxu0 0.0
  %109 = vmatprep.subr.mxu0 0.0
  %110 = vmatpush2.msra.mxu0 0.0
  %111 = vmatprep.subr.mxu0 0.0
  %112 = vmatpush2.msra.mxu0 0.0
  %113 = vmatprep.mubr.f32.mxu0 0.0
  %114 = vmatmul.mubr.f32.gmra.mxu0 %v40
  %v115 = vpop.f32.mrf.mxu0
  %v116 = vadd.f32 %v36, %v115
  %v117 = vpop.f32.mrf.mxu0
  %118 = vmatprep.mubr.f32.mxu0 0.0
  %119 = vmatmul.mubr.f32.gmra.mxu0 %v43
  %v120 = vpop.f32.mrf.mxu0
  %v121 = vadd.f32 %v36, %v120
  %v122 = vpop.f32.mrf.mxu0
  %123 = vdwg.mxu0
  %v124 = vld [vmem:[%s3] sm:$0xff]
  %v125 = vld [vmem:[%s3 + $0x8] sm:$0xff]
  %v126 = vld [vmem:[%s3 + $0x10] sm:$0xff]
  %v127 = vld [vmem:[%s3 + $0x18] sm:$0xff]
  %v128 = vld [vmem:[%s5] sm:$0xff]
  %v129 = vld [vmem:[%s5 + $0x8] sm:$0xff]
  %v130 = vld [vmem:[%s5 + $0x10] sm:$0xff]
  %v131 = vld [vmem:[%s5 + $0x18] sm:$0xff]
  %v132 = vld [vmem:[#allocation2] sm:$0x1]
  %v133 = vld [vmem:[%s4] sm:$0x1]
  %v135 = vlaneseq
  %v136 = vshrl.u32 %v135, 7
  %v137 = vsub.s32 0, %v136
  %v138 = vrot.slane %v133, %v137
  %vm139 = vcmask 261120
  %v141 = vsel %vm139, 0.0, 0
  %143 = vmatprep.subr.mxu0 0.0
  %144 = vmatpush1.msra.mxu0 0.0
  %145 = vmatprep.subr.mxu0 0.0
  %146 = vmatpush1.msra.mxu0 0.0
  %147 = vmatprep.subr.mxu0 0.0
  %148 = vmatpush1.msra.mxu0 0.0
  %149 = vmatprep.subr.mxu0 0.0
  %150 = vmatpush1.msra.mxu0 0.0
  %151 = vmatprep.subr.mxu0 0.0
  %152 = vmatpush1.msra.mxu0 0.0
  %153 = vmatprep.subr.mxu0 0.0
  %154 = vmatpush1.msra.mxu0 0.0
  %155 = vmatprep.subr.mxu0 0.0
  %156 = vmatpush1.msra.mxu0 0.0
  %157 = vmatprep.subr.mxu0 0.0
  %158 = vmatpush1.msra.mxu0 0.0
  %159 = vmatprep.subr.mxu0 0.0
  %160 = vmatpush1.msra.mxu0 0.0
  %161 = vmatprep.subr.mxu0 0.0
  %162 = vmatpush1.msra.mxu0 0.0
  %163 = vmatprep.subr.mxu0 0.0
  %164 = vmatpush1.msra.mxu0 0.0
  %165 = vmatprep.subr.mxu0 0.0
  %166 = vmatpush1.msra.mxu0 0.0
  %167 = vmatprep.subr.mxu0 0.0
  %168 = vmatpush1.msra.mxu0 %v127
  %169 = vmatprep.subr.mxu0 0.0
  %170 = vmatpush1.msra.mxu0 %v126
  %171 = vmatprep.subr.mxu0 0.0
  %172 = vmatpush1.msra.mxu0 %v125
  %173 = vmatprep.subr.mxu0 0.0
  %174 = vmatpush1.msra.mxu0 %v124
  %175 = vmatprep.subr.mxu0 0.0
  %176 = vmatpush2.msra.mxu0 0.0
  %177 = vmatprep.subr.mxu0 0.0
  %178 = vmatpush2.msra.mxu0 0.0
  %179 = vmatprep.subr.mxu0 0.0
  %180 = vmatpush2.msra.mxu0 0.0
  %181 = vmatprep.subr.mxu0 0.0
  %182 = vmatpush2.msra.mxu0 0.0
  %183 = vmatprep.subr.mxu0 0.0
  %184 = vmatpush2.msra.mxu0 0.0
  %185 = vmatprep.subr.mxu0 0.0
  %186 = vmatpush2.msra.mxu0 0.0
  %187 = vmatprep.subr.mxu0 0.0
  %188 = vmatpush2.msra.mxu0 0.0
  %189 = vmatprep.subr.mxu0 0.0
  %190 = vmatpush2.msra.mxu0 0.0
  %191 = vmatprep.subr.mxu0 0.0
  %192 = vmatpush2.msra.mxu0 0.0
  %193 = vmatprep.subr.mxu0 0.0
  %194 = vmatpush2.msra.mxu0 0.0
  %195 = vmatprep.subr.mxu0 0.0
  %196 = vmatpush2.msra.mxu0 0.0
  %197 = vmatprep.subr.mxu0 0.0
  %198 = vmatpush2.msra.mxu0 0.0
  %199 = vmatprep.subr.mxu0 0.0
  %200 = vmatpush2.msra.mxu0 0.0
  %201 = vmatprep.subr.mxu0 0.0
  %202 = vmatpush2.msra.mxu0 0.0
  %203 = vmatprep.subr.mxu0 0.0
  %204 = vmatpush2.msra.mxu0 0.0
  %205 = vmatprep.subr.mxu0 0.0
  %206 = vmatpush2.msra.mxu0 0.0
  %207 = vmatprep.mubr.f32.mxu0 0.0
  %208 = vmatmul.mubr.f32.gmra.mxu0 %v141
  %v209 = vpop.f32.mrf.mxu0
  %v210 = vadd.f32 0.0, %v209
  %v211 = vpop.f32.mrf.mxu0
  %212 = vdwg.mxu0
  %v213 = vadd.f32 %v116, %v210
  %v214 = vxor.u32 %v213, 2147483648
  %v215 = vmul.f32 %v214, 1.442695
  %v216 = vpow.pop %v215
  %v217 = vadd.f32 %v216, 1.0
  %v218 = vrcp.pop %v217
  %v219 = vmul.f32 1.0, %v218
  %220 = vrot.lane.b32.xlu0 %v138, 64
  %v221 = vpop.permute.xlu0 %220
  %v223 = vadd.f32 %v210, %v221
  %225 = vrot.lane.b32.xlu0 %v223, 64
  %v226 = vpop.permute.xlu0 %225
  %v228 = vmul.f32 %v219, %v226
  %230 = vrot.lane.b32.xlu0 %v228, 64
  %v231 = vpop.permute.xlu0 %230
  %v233 = vadd.f32 %v116, %v231
  %v234 = vtanh.pop %v233
  %v235 = vsub.f32 0.0, %v234
  %237 = vrot.lane.b32.xlu0 %v235, 96
  %v238 = vpop.permute.xlu0 %237
  %v240 = vmul.f32 %v219, %v238
  %242 = vrot.lane.b32.xlu0 %v240, 32
  %v243 = vpop.permute.xlu0 %242
  %v245 = vadd.f32 %v234, %v243
  %v247 = vlaneseq
  %v248 = vshrl.u32 %v247, 7
  %v249 = vsub.s32 0, %v248
  %v250 = vrot.slane %v132, %v249
  %253 = vrot.lane.b32.xlu0 %v245, 64
  %v254 = vpop.permute.xlu0 %253
  %v255 = vsel %vm139, %v254, 0
  %257 = vmatprep.subr.mxu0 0.0
  %258 = vmatpush1.msra.mxu0 0.0
  %259 = vmatprep.subr.mxu0 0.0
  %260 = vmatpush1.msra.mxu0 0.0
  %261 = vmatprep.subr.mxu0 0.0
  %262 = vmatpush1.msra.mxu0 0.0
  %263 = vmatprep.subr.mxu0 0.0
  %264 = vmatpush1.msra.mxu0 0.0
  %265 = vmatprep.subr.mxu0 0.0
  %266 = vmatpush1.msra.mxu0 0.0
  %267 = vmatprep.subr.mxu0 0.0
  %268 = vmatpush1.msra.mxu0 0.0
  %269 = vmatprep.subr.mxu0 0.0
  %270 = vmatpush1.msra.mxu0 0.0
  %271 = vmatprep.subr.mxu0 0.0
  %272 = vmatpush1.msra.mxu0 0.0
  %273 = vmatprep.subr.mxu0 0.0
  %274 = vmatpush1.msra.mxu0 0.0
  %275 = vmatprep.subr.mxu0 0.0
  %276 = vmatpush1.msra.mxu0 0.0
  %277 = vmatprep.subr.mxu0 0.0
  %278 = vmatpush1.msra.mxu0 0.0
  %279 = vmatprep.subr.mxu0 0.0
  %280 = vmatpush1.msra.mxu0 0.0
  %281 = vmatprep.subr.mxu0 0.0
  %282 = vmatpush1.msra.mxu0 %v131
  %283 = vmatprep.subr.mxu0 0.0
  %284 = vmatpush1.msra.mxu0 %v130
  %285 = vmatprep.subr.mxu0 0.0
  %286 = vmatpush1.msra.mxu0 %v129
  %287 = vmatprep.subr.mxu0 0.0
  %288 = vmatpush1.msra.mxu0 %v128
  %289 = vmatprep.subr.mxu0 0.0
  %290 = vmatpush2.msra.mxu0 0.0
  %291 = vmatprep.subr.mxu0 0.0
  %292 = vmatpush2.msra.mxu0 0.0
  %293 = vmatprep.subr.mxu0 0.0
  %294 = vmatpush2.msra.mxu0 0.0
  %295 = vmatprep.subr.mxu0 0.0
  %296 = vmatpush2.msra.mxu0 0.0
  %297 = vmatprep.subr.mxu0 0.0
  %298 = vmatpush2.msra.mxu0 0.0
  %299 = vmatprep.subr.mxu0 0.0
  %300 = vmatpush2.msra.mxu0 0.0
  %301 = vmatprep.subr.mxu0 0.0
  %302 = vmatpush2.msra.mxu0 0.0
  %303 = vmatprep.subr.mxu0 0.0
  %304 = vmatpush2.msra.mxu0 0.0
  %305 = vmatprep.subr.mxu0 0.0
  %306 = vmatpush2.msra.mxu0 0.0
  %307 = vmatprep.subr.mxu0 0.0
  %308 = vmatpush2.msra.mxu0 0.0
  %309 = vmatprep.subr.mxu0 0.0
  %310 = vmatpush2.msra.mxu0 0.0
  %311 = vmatprep.subr.mxu0 0.0
  %312 = vmatpush2.msra.mxu0 0.0
  %313 = vmatprep.subr.mxu0 0.0
  %314 = vmatpush2.msra.mxu0 0.0
  %315 = vmatprep.subr.mxu0 0.0
  %316 = vmatpush2.msra.mxu0 0.0
  %317 = vmatprep.subr.mxu0 0.0
  %318 = vmatpush2.msra.mxu0 0.0
  %319 = vmatprep.subr.mxu0 0.0
  %320 = vmatpush2.msra.mxu0 0.0
  %321 = vmatprep.mubr.f32.mxu0 0.0
  %322 = vmatmul.mubr.f32.gmra.mxu0 %v255
  %v323 = vpop.f32.mrf.mxu0
  %v324 = vadd.f32 %v250, %v323
  %v325 = vpop.f32.mrf.mxu0
  %326 = vdwg.mxu0
  %vm327 = vcmask 1024
  %328 = vst.msk [vmem:[%s7] sm:$0x3] %vm327, %v324
  %329 = vmatprep.subr.mxu0 0.0
  %330 = vmatpush1.msra.mxu0 0.0
  %331 = vmatprep.subr.mxu0 0.0
  %332 = vmatpush1.msra.mxu0 0.0
  %333 = vmatprep.subr.mxu0 0.0
  %334 = vmatpush1.msra.mxu0 0.0
  %335 = vmatprep.subr.mxu0 0.0
  %336 = vmatpush1.msra.mxu0 0.0
  %337 = vmatprep.subr.mxu0 0.0
  %338 = vmatpush1.msra.mxu0 0.0
  %339 = vmatprep.subr.mxu0 0.0
  %340 = vmatpush1.msra.mxu0 0.0
  %341 = vmatprep.subr.mxu0 0.0
  %342 = vmatpush1.msra.mxu0 0.0
  %343 = vmatprep.subr.mxu0 0.0
  %344 = vmatpush1.msra.mxu0 0.0
  %345 = vmatprep.subr.mxu0 0.0
  %346 = vmatpush1.msra.mxu0 0.0
  %347 = vmatprep.subr.mxu0 0.0
  %348 = vmatpush1.msra.mxu0 0.0
  %349 = vmatprep.subr.mxu0 0.0
  %350 = vmatpush1.msra.mxu0 0.0
  %351 = vmatprep.subr.mxu0 0.0
  %352 = vmatpush1.msra.mxu0 0.0
  %353 = vmatprep.subr.mxu0 0.0
  %354 = vmatpush1.msra.mxu0 %v127
  %355 = vmatprep.subr.mxu0 0.0
  %356 = vmatpush1.msra.mxu0 %v126
  %357 = vmatprep.subr.mxu0 0.0
  %358 = vmatpush1.msra.mxu0 %v125
  %359 = vmatprep.subr.mxu0 0.0
  %360 = vmatpush1.msra.mxu0 %v124
  %361 = vmatprep.subr.mxu0 0.0
  %362 = vmatpush2.msra.mxu0 0.0
  %363 = vmatprep.subr.mxu0 0.0
  %364 = vmatpush2.msra.mxu0 0.0
  %365 = vmatprep.subr.mxu0 0.0
  %366 = vmatpush2.msra.mxu0 0.0
  %367 = vmatprep.subr.mxu0 0.0
  %368 = vmatpush2.msra.mxu0 0.0
  %369 = vmatprep.subr.mxu0 0.0
  %370 = vmatpush2.msra.mxu0 0.0
  %371 = vmatprep.subr.mxu0 0.0
  %372 = vmatpush2.msra.mxu0 0.0
  %373 = vmatprep.subr.mxu0 0.0
  %374 = vmatpush2.msra.mxu0 0.0
  %375 = vmatprep.subr.mxu0 0.0
  %376 = vmatpush2.msra.mxu0 0.0
  %377 = vmatprep.subr.mxu0 0.0
  %378 = vmatpush2.msra.mxu0 0.0
  %379 = vmatprep.subr.mxu0 0.0
  %380 = vmatpush2.msra.mxu0 0.0
  %381 = vmatprep.subr.mxu0 0.0
  %382 = vmatpush2.msra.mxu0 0.0
  %383 = vmatprep.subr.mxu0 0.0
  %384 = vmatpush2.msra.mxu0 0.0
  %385 = vmatprep.subr.mxu0 0.0
  %386 = vmatpush2.msra.mxu0 0.0
  %387 = vmatprep.subr.mxu0 0.0
  %388 = vmatpush2.msra.mxu0 0.0
  %389 = vmatprep.subr.mxu0 0.0
  %390 = vmatpush2.msra.mxu0 0.0
  %391 = vmatprep.subr.mxu0 0.0
  %392 = vmatpush2.msra.mxu0 0.0
  %393 = vmatprep.mubr.f32.mxu0 0.0
  %394 = vmatmul.mubr.f32.gmra.mxu0 %v255
  %v395 = vpop.f32.mrf.mxu0
  %v396 = vadd.f32 0.0, %v395
  %v397 = vpop.f32.mrf.mxu0
  %398 = vdwg.mxu0
  %v400 = vrot.slane %v396, 6
  %v402 = vadd.f32 %v116, %v400
  %v403 = vxor.u32 %v402, 2147483648
  %v404 = vmul.f32 %v403, 1.442695
  %v405 = vpow.pop %v404
  %v406 = vadd.f32 %v405, 1.0
  %v407 = vrcp.pop %v406
  %v408 = vmul.f32 1.0, %v407
  %v409 = vadd.f32 %v396, %v221
  %v411 = vrot.slane %v409, 6
  %412 = vrot.lane.b32.xlu0 %v411, 64
  %v413 = vpop.permute.xlu0 %412
  %v415 = vmul.f32 %v408, %v413
  %417 = vrot.lane.b32.xlu0 %v415, 64
  %v418 = vpop.permute.xlu0 %417
  %v420 = vadd.f32 %v116, %v418
  %v421 = vtanh.pop %v420
  %v423 = vrot.slane %v421, 2
  %v425 = vsub.f32 %v245, %v423
  %v427 = vrot.slane %v425, 6
  %428 = vrot.lane.b32.xlu0 %v427, 96
  %v429 = vpop.permute.xlu0 %428
  %v431 = vmul.f32 %v408, %v429
  %433 = vrot.lane.b32.xlu0 %v431, 32
  %v434 = vpop.permute.xlu0 %433
  %v436 = vadd.f32 %v421, %v434
  %v438 = vrot.slane %v436, 2
  %439 = vrot.lane.b32.xlu0 %v438, 64
  %v440 = vpop.permute.xlu0 %439
  %v441 = vsel %vm139, %v440, 0
  %443 = vmatprep.subr.mxu0 0.0
  %444 = vmatpush1.msra.mxu0 0.0
  %445 = vmatprep.subr.mxu0 0.0
  %446 = vmatpush1.msra.mxu0 0.0
  %447 = vmatprep.subr.mxu0 0.0
  %448 = vmatpush1.msra.mxu0 0.0
  %449 = vmatprep.subr.mxu0 0.0
  %450 = vmatpush1.msra.mxu0 0.0
  %451 = vmatprep.subr.mxu0 0.0
  %452 = vmatpush1.msra.mxu0 0.0
  %453 = vmatprep.subr.mxu0 0.0
  %454 = vmatpush1.msra.mxu0 0.0
  %455 = vmatprep.subr.mxu0 0.0
  %456 = vmatpush1.msra.mxu0 0.0
  %457 = vmatprep.subr.mxu0 0.0
  %458 = vmatpush1.msra.mxu0 0.0
  %459 = vmatprep.subr.mxu0 0.0
  %460 = vmatpush1.msra.mxu0 0.0
  %461 = vmatprep.subr.mxu0 0.0
  %462 = vmatpush1.msra.mxu0 0.0
  %463 = vmatprep.subr.mxu0 0.0
  %464 = vmatpush1.msra.mxu0 0.0
  %465 = vmatprep.subr.mxu0 0.0
  %466 = vmatpush1.msra.mxu0 0.0
  %467 = vmatprep.subr.mxu0 0.0
  %468 = vmatpush1.msra.mxu0 %v131
  %469 = vmatprep.subr.mxu0 0.0
  %470 = vmatpush1.msra.mxu0 %v130
  %471 = vmatprep.subr.mxu0 0.0
  %472 = vmatpush1.msra.mxu0 %v129
  %473 = vmatprep.subr.mxu0 0.0
  %474 = vmatpush1.msra.mxu0 %v128
  %475 = vmatprep.subr.mxu0 0.0
  %476 = vmatpush2.msra.mxu0 0.0
  %477 = vmatprep.subr.mxu0 0.0
  %478 = vmatpush2.msra.mxu0 0.0
  %479 = vmatprep.subr.mxu0 0.0
  %480 = vmatpush2.msra.mxu0 0.0
  %481 = vmatprep.subr.mxu0 0.0
  %482 = vmatpush2.msra.mxu0 0.0
  %483 = vmatprep.subr.mxu0 0.0
  %484 = vmatpush2.msra.mxu0 0.0
  %485 = vmatprep.subr.mxu0 0.0
  %486 = vmatpush2.msra.mxu0 0.0
  %487 = vmatprep.subr.mxu0 0.0
  %488 = vmatpush2.msra.mxu0 0.0
  %489 = vmatprep.subr.mxu0 0.0
  %490 = vmatpush2.msra.mxu0 0.0
  %491 = vmatprep.subr.mxu0 0.0
  %492 = vmatpush2.msra.mxu0 0.0
  %493 = vmatprep.subr.mxu0 0.0
  %494 = vmatpush2.msra.mxu0 0.0
  %495 = vmatprep.subr.mxu0 0.0
  %496 = vmatpush2.msra.mxu0 0.0
  %497 = vmatprep.subr.mxu0 0.0
  %498 = vmatpush2.msra.mxu0 0.0
  %499 = vmatprep.subr.mxu0 0.0
  %500 = vmatpush2.msra.mxu0 0.0
  %501 = vmatprep.subr.mxu0 0.0
  %502 = vmatpush2.msra.mxu0 0.0
  %503 = vmatprep.subr.mxu0 0.0
  %504 = vmatpush2.msra.mxu0 0.0
  %505 = vmatprep.subr.mxu0 0.0
  %506 = vmatpush2.msra.mxu0 0.0
  %507 = vmatprep.mubr.f32.mxu0 0.0
  %508 = vmatmul.mubr.f32.gmra.mxu0 %v441
  %v509 = vpop.f32.mrf.mxu0
  %v510 = vadd.f32 %v250, %v509
  %v511 = vpop.f32.mrf.mxu0
  %512 = vdwg.mxu0
  %513 = vst.msk [vmem:[%s7 + $0x2] sm:$0x3] %vm327, %v510
  %514 = vmatprep.subr.mxu0 0.0
  %515 = vmatpush1.msra.mxu0 0.0
  %516 = vmatprep.subr.mxu0 0.0
  %517 = vmatpush1.msra.mxu0 0.0
  %518 = vmatprep.subr.mxu0 0.0
  %519 = vmatpush1.msra.mxu0 0.0
  %520 = vmatprep.subr.mxu0 0.0
  %521 = vmatpush1.msra.mxu0 0.0
  %522 = vmatprep.subr.mxu0 0.0
  %523 = vmatpush1.msra.mxu0 0.0
  %524 = vmatprep.subr.mxu0 0.0
  %525 = vmatpush1.msra.mxu0 0.0
  %526 = vmatprep.subr.mxu0 0.0
  %527 = vmatpush1.msra.mxu0 0.0
  %528 = vmatprep.subr.mxu0 0.0
  %529 = vmatpush1.msra.mxu0 0.0
  %530 = vmatprep.subr.mxu0 0.0
  %531 = vmatpush1.msra.mxu0 0.0
  %532 = vmatprep.subr.mxu0 0.0
  %533 = vmatpush1.msra.mxu0 0.0
  %534 = vmatprep.subr.mxu0 0.0
  %535 = vmatpush1.msra.mxu0 0.0
  %536 = vmatprep.subr.mxu0 0.0
  %537 = vmatpush1.msra.mxu0 0.0
  %538 = vmatprep.subr.mxu0 0.0
  %539 = vmatpush1.msra.mxu0 %v127
  %540 = vmatprep.subr.mxu0 0.0
  %541 = vmatpush1.msra.mxu0 %v126
  %542 = vmatprep.subr.mxu0 0.0
  %543 = vmatpush1.msra.mxu0 %v125
  %544 = vmatprep.subr.mxu0 0.0
  %545 = vmatpush1.msra.mxu0 %v124
  %546 = vmatprep.subr.mxu0 0.0
  %547 = vmatpush2.msra.mxu0 0.0
  %548 = vmatprep.subr.mxu0 0.0
  %549 = vmatpush2.msra.mxu0 0.0
  %550 = vmatprep.subr.mxu0 0.0
  %551 = vmatpush2.msra.mxu0 0.0
  %552 = vmatprep.subr.mxu0 0.0
  %553 = vmatpush2.msra.mxu0 0.0
  %554 = vmatprep.subr.mxu0 0.0
  %555 = vmatpush2.msra.mxu0 0.0
  %556 = vmatprep.subr.mxu0 0.0
  %557 = vmatpush2.msra.mxu0 0.0
  %558 = vmatprep.subr.mxu0 0.0
  %559 = vmatpush2.msra.mxu0 0.0
  %560 = vmatprep.subr.mxu0 0.0
  %561 = vmatpush2.msra.mxu0 0.0
  %562 = vmatprep.subr.mxu0 0.0
  %563 = vmatpush2.msra.mxu0 0.0
  %564 = vmatprep.subr.mxu0 0.0
  %565 = vmatpush2.msra.mxu0 0.0
  %566 = vmatprep.subr.mxu0 0.0
  %567 = vmatpush2.msra.mxu0 0.0
  %568 = vmatprep.subr.mxu0 0.0
  %569 = vmatpush2.msra.mxu0 0.0
  %570 = vmatprep.subr.mxu0 0.0
  %571 = vmatpush2.msra.mxu0 0.0
  %572 = vmatprep.subr.mxu0 0.0
  %573 = vmatpush2.msra.mxu0 0.0
  %574 = vmatprep.subr.mxu0 0.0
  %575 = vmatpush2.msra.mxu0 0.0
  %576 = vmatprep.subr.mxu0 0.0
  %577 = vmatpush2.msra.mxu0 0.0
  %578 = vmatprep.mubr.f32.mxu0 0.0
  %579 = vmatmul.mubr.f32.gmra.mxu0 %v441
  %v580 = vpop.f32.mrf.mxu0
  %v581 = vadd.f32 0.0, %v580
  %v582 = vpop.f32.mrf.mxu0
  %583 = vdwg.mxu0
  %v585 = vrot.slane %v581, 4
  %v587 = vadd.f32 %v116, %v585
  %v588 = vxor.u32 %v587, 2147483648
  %v589 = vmul.f32 %v588, 1.442695
  %v590 = vpow.pop %v589
  %v591 = vadd.f32 %v590, 1.0
  %v592 = vrcp.pop %v591
  %v593 = vmul.f32 1.0, %v592
  %v594 = vadd.f32 %v581, %v221
  %v596 = vrot.slane %v594, 4
  %597 = vrot.lane.b32.xlu0 %v596, 64
  %v598 = vpop.permute.xlu0 %597
  %v600 = vmul.f32 %v593, %v598
  %602 = vrot.lane.b32.xlu0 %v600, 64
  %v603 = vpop.permute.xlu0 %602
  %v605 = vadd.f32 %v116, %v603
  %v606 = vtanh.pop %v605
  %v608 = vrot.slane %v606, 2
  %v610 = vsub.f32 %v436, %v608
  %v612 = vrot.slane %v610, 6
  %613 = vrot.lane.b32.xlu0 %v612, 96
  %v614 = vpop.permute.xlu0 %613
  %v616 = vmul.f32 %v593, %v614
  %618 = vrot.lane.b32.xlu0 %v616, 32
  %v619 = vpop.permute.xlu0 %618
  %v621 = vadd.f32 %v606, %v619
  %v623 = vrot.slane %v621, 4
  %624 = vrot.lane.b32.xlu0 %v623, 64
  %v625 = vpop.permute.xlu0 %624
  %v626 = vsel %vm139, %v625, 0
  %628 = vmatprep.subr.mxu0 0.0
  %629 = vmatpush1.msra.mxu0 0.0
  %630 = vmatprep.subr.mxu0 0.0
  %631 = vmatpush1.msra.mxu0 0.0
  %632 = vmatprep.subr.mxu0 0.0
  %633 = vmatpush1.msra.mxu0 0.0
  %634 = vmatprep.subr.mxu0 0.0
  %635 = vmatpush1.msra.mxu0 0.0
  %636 = vmatprep.subr.mxu0 0.0
  %637 = vmatpush1.msra.mxu0 0.0
  %638 = vmatprep.subr.mxu0 0.0
  %639 = vmatpush1.msra.mxu0 0.0
  %640 = vmatprep.subr.mxu0 0.0
  %641 = vmatpush1.msra.mxu0 0.0
  %642 = vmatprep.subr.mxu0 0.0
  %643 = vmatpush1.msra.mxu0 0.0
  %644 = vmatprep.subr.mxu0 0.0
  %645 = vmatpush1.msra.mxu0 0.0
  %646 = vmatprep.subr.mxu0 0.0
  %647 = vmatpush1.msra.mxu0 0.0
  %648 = vmatprep.subr.mxu0 0.0
  %649 = vmatpush1.msra.mxu0 0.0
  %650 = vmatprep.subr.mxu0 0.0
  %651 = vmatpush1.msra.mxu0 0.0
  %652 = vmatprep.subr.mxu0 0.0
  %653 = vmatpush1.msra.mxu0 %v131
  %654 = vmatprep.subr.mxu0 0.0
  %655 = vmatpush1.msra.mxu0 %v130
  %656 = vmatprep.subr.mxu0 0.0
  %657 = vmatpush1.msra.mxu0 %v129
  %658 = vmatprep.subr.mxu0 0.0
  %659 = vmatpush1.msra.mxu0 %v128
  %660 = vmatprep.subr.mxu0 0.0
  %661 = vmatpush2.msra.mxu0 0.0
  %662 = vmatprep.subr.mxu0 0.0
  %663 = vmatpush2.msra.mxu0 0.0
  %664 = vmatprep.subr.mxu0 0.0
  %665 = vmatpush2.msra.mxu0 0.0
  %666 = vmatprep.subr.mxu0 0.0
  %667 = vmatpush2.msra.mxu0 0.0
  %668 = vmatprep.subr.mxu0 0.0
  %669 = vmatpush2.msra.mxu0 0.0
  %670 = vmatprep.subr.mxu0 0.0
  %671 = vmatpush2.msra.mxu0 0.0
  %672 = vmatprep.subr.mxu0 0.0
  %673 = vmatpush2.msra.mxu0 0.0
  %674 = vmatprep.subr.mxu0 0.0
  %675 = vmatpush2.msra.mxu0 0.0
  %676 = vmatprep.subr.mxu0 0.0
  %677 = vmatpush2.msra.mxu0 0.0
  %678 = vmatprep.subr.mxu0 0.0
  %679 = vmatpush2.msra.mxu0 0.0
  %680 = vmatprep.subr.mxu0 0.0
  %681 = vmatpush2.msra.mxu0 0.0
  %682 = vmatprep.subr.mxu0 0.0
  %683 = vmatpush2.msra.mxu0 0.0
  %684 = vmatprep.subr.mxu0 0.0
  %685 = vmatpush2.msra.mxu0 0.0
  %686 = vmatprep.subr.mxu0 0.0
  %687 = vmatpush2.msra.mxu0 0.0
  %688 = vmatprep.subr.mxu0 0.0
  %689 = vmatpush2.msra.mxu0 0.0
  %690 = vmatprep.subr.mxu0 0.0
  %691 = vmatpush2.msra.mxu0 0.0
  %692 = vmatprep.mubr.f32.mxu0 0.0
  %693 = vmatmul.mubr.f32.gmra.mxu0 %v626
  %v694 = vpop.f32.mrf.mxu0
  %v695 = vadd.f32 %v250, %v694
  %v696 = vpop.f32.mrf.mxu0
  %697 = vdwg.mxu0
  %698 = vst.msk [vmem:[%s7 + $0x4] sm:$0x3] %vm327, %v695
  %699 = vmatprep.subr.mxu0 0.0
  %700 = vmatpush1.msra.mxu0 0.0
  %701 = vmatprep.subr.mxu0 0.0
  %702 = vmatpush1.msra.mxu0 0.0
  %703 = vmatprep.subr.mxu0 0.0
  %704 = vmatpush1.msra.mxu0 0.0
  %705 = vmatprep.subr.mxu0 0.0
  %706 = vmatpush1.msra.mxu0 0.0
  %707 = vmatprep.subr.mxu0 0.0
  %708 = vmatpush1.msra.mxu0 0.0
  %709 = vmatprep.subr.mxu0 0.0
  %710 = vmatpush1.msra.mxu0 0.0
  %711 = vmatprep.subr.mxu0 0.0
  %712 = vmatpush1.msra.mxu0 0.0
  %713 = vmatprep.subr.mxu0 0.0
  %714 = vmatpush1.msra.mxu0 0.0
  %715 = vmatprep.subr.mxu0 0.0
  %716 = vmatpush1.msra.mxu0 0.0
  %717 = vmatprep.subr.mxu0 0.0
  %718 = vmatpush1.msra.mxu0 0.0
  %719 = vmatprep.subr.mxu0 0.0
  %720 = vmatpush1.msra.mxu0 0.0
  %721 = vmatprep.subr.mxu0 0.0
  %722 = vmatpush1.msra.mxu0 0.0
  %723 = vmatprep.subr.mxu0 0.0
  %724 = vmatpush1.msra.mxu0 %v127
  %725 = vmatprep.subr.mxu0 0.0
  %726 = vmatpush1.msra.mxu0 %v126
  %727 = vmatprep.subr.mxu0 0.0
  %728 = vmatpush1.msra.mxu0 %v125
  %729 = vmatprep.subr.mxu0 0.0
  %730 = vmatpush1.msra.mxu0 %v124
  %731 = vmatprep.subr.mxu0 0.0
  %732 = vmatpush2.msra.mxu0 0.0
  %733 = vmatprep.subr.mxu0 0.0
  %734 = vmatpush2.msra.mxu0 0.0
  %735 = vmatprep.subr.mxu0 0.0
  %736 = vmatpush2.msra.mxu0 0.0
  %737 = vmatprep.subr.mxu0 0.0
  %738 = vmatpush2.msra.mxu0 0.0
  %739 = vmatprep.subr.mxu0 0.0
  %740 = vmatpush2.msra.mxu0 0.0
  %741 = vmatprep.subr.mxu0 0.0
  %742 = vmatpush2.msra.mxu0 0.0
  %743 = vmatprep.subr.mxu0 0.0
  %744 = vmatpush2.msra.mxu0 0.0
  %745 = vmatprep.subr.mxu0 0.0
  %746 = vmatpush2.msra.mxu0 0.0
  %747 = vmatprep.subr.mxu0 0.0
  %748 = vmatpush2.msra.mxu0 0.0
  %749 = vmatprep.subr.mxu0 0.0
  %750 = vmatpush2.msra.mxu0 0.0
  %751 = vmatprep.subr.mxu0 0.0
  %752 = vmatpush2.msra.mxu0 0.0
  %753 = vmatprep.subr.mxu0 0.0
  %754 = vmatpush2.msra.mxu0 0.0
  %755 = vmatprep.subr.mxu0 0.0
  %756 = vmatpush2.msra.mxu0 0.0
  %757 = vmatprep.subr.mxu0 0.0
  %758 = vmatpush2.msra.mxu0 0.0
  %759 = vmatprep.subr.mxu0 0.0
  %760 = vmatpush2.msra.mxu0 0.0
  %761 = vmatprep.subr.mxu0 0.0
  %762 = vmatpush2.msra.mxu0 0.0
  %763 = vmatprep.mubr.f32.mxu0 0.0
  %764 = vmatmul.mubr.f32.gmra.mxu0 %v626
  %v765 = vpop.f32.mrf.mxu0
  %v766 = vadd.f32 0.0, %v765
  %v767 = vpop.f32.mrf.mxu0
  %768 = vdwg.mxu0
  %v770 = vrot.slane %v766, 2
  %v772 = vadd.f32 %v116, %v770
  %v773 = vxor.u32 %v772, 2147483648
  %v774 = vmul.f32 %v773, 1.442695
  %v775 = vpow.pop %v774
  %v776 = vadd.f32 %v775, 1.0
  %v777 = vrcp.pop %v776
  %v778 = vmul.f32 1.0, %v777
  %v779 = vadd.f32 %v766, %v221
  %v781 = vrot.slane %v779, 2
  %782 = vrot.lane.b32.xlu0 %v781, 64
  %v783 = vpop.permute.xlu0 %782
  %v785 = vmul.f32 %v778, %v783
  %787 = vrot.lane.b32.xlu0 %v785, 64
  %v788 = vpop.permute.xlu0 %787
  %v790 = vadd.f32 %v116, %v788
  %v791 = vtanh.pop %v790
  %v793 = vrot.slane %v791, 2
  %v795 = vsub.f32 %v621, %v793
  %v797 = vrot.slane %v795, 6
  %798 = vrot.lane.b32.xlu0 %v797, 96
  %v799 = vpop.permute.xlu0 %798
  %v801 = vmul.f32 %v778, %v799
  %803 = vrot.lane.b32.xlu0 %v801, 32
  %v804 = vpop.permute.xlu0 %803
  %v806 = vadd.f32 %v791, %v804
  %v808 = vrot.slane %v806, 6
  %809 = vrot.lane.b32.xlu0 %v808, 64
  %v810 = vpop.permute.xlu0 %809
  %v811 = vsel %vm139, %v810, 0
  %813 = vmatprep.subr.mxu0 0.0
  %814 = vmatpush1.msra.mxu0 0.0
  %815 = vmatprep.subr.mxu0 0.0
  %816 = vmatpush1.msra.mxu0 0.0
  %817 = vmatprep.subr.mxu0 0.0
  %818 = vmatpush1.msra.mxu0 0.0
  %819 = vmatprep.subr.mxu0 0.0
  %820 = vmatpush1.msra.mxu0 0.0
  %821 = vmatprep.subr.mxu0 0.0
  %822 = vmatpush1.msra.mxu0 0.0
  %823 = vmatprep.subr.mxu0 0.0
  %824 = vmatpush1.msra.mxu0 0.0
  %825 = vmatprep.subr.mxu0 0.0
  %826 = vmatpush1.msra.mxu0 0.0
  %827 = vmatprep.subr.mxu0 0.0
  %828 = vmatpush1.msra.mxu0 0.0
  %829 = vmatprep.subr.mxu0 0.0
  %830 = vmatpush1.msra.mxu0 0.0
  %831 = vmatprep.subr.mxu0 0.0
  %832 = vmatpush1.msra.mxu0 0.0
  %833 = vmatprep.subr.mxu0 0.0
  %834 = vmatpush1.msra.mxu0 0.0
  %835 = vmatprep.subr.mxu0 0.0
  %836 = vmatpush1.msra.mxu0 0.0
  %837 = vmatprep.subr.mxu0 0.0
  %838 = vmatpush1.msra.mxu0 %v131
  %839 = vmatprep.subr.mxu0 0.0
  %840 = vmatpush1.msra.mxu0 %v130
  %841 = vmatprep.subr.mxu0 0.0
  %842 = vmatpush1.msra.mxu0 %v129
  %843 = vmatprep.subr.mxu0 0.0
  %844 = vmatpush1.msra.mxu0 %v128
  %845 = vmatprep.subr.mxu0 0.0
  %846 = vmatpush2.msra.mxu0 0.0
  %847 = vmatprep.subr.mxu0 0.0
  %848 = vmatpush2.msra.mxu0 0.0
  %849 = vmatprep.subr.mxu0 0.0
  %850 = vmatpush2.msra.mxu0 0.0
  %851 = vmatprep.subr.mxu0 0.0
  %852 = vmatpush2.msra.mxu0 0.0
  %853 = vmatprep.subr.mxu0 0.0
  %854 = vmatpush2.msra.mxu0 0.0
  %855 = vmatprep.subr.mxu0 0.0
  %856 = vmatpush2.msra.mxu0 0.0
  %857 = vmatprep.subr.mxu0 0.0
  %858 = vmatpush2.msra.mxu0 0.0
  %859 = vmatprep.subr.mxu0 0.0
  %860 = vmatpush2.msra.mxu0 0.0
  %861 = vmatprep.subr.mxu0 0.0
  %862 = vmatpush2.msra.mxu0 0.0
  %863 = vmatprep.subr.mxu0 0.0
  %864 = vmatpush2.msra.mxu0 0.0
  %865 = vmatprep.subr.mxu0 0.0
  %866 = vmatpush2.msra.mxu0 0.0
  %867 = vmatprep.subr.mxu0 0.0
  %868 = vmatpush2.msra.mxu0 0.0
  %869 = vmatprep.subr.mxu0 0.0
  %870 = vmatpush2.msra.mxu0 0.0
  %871 = vmatprep.subr.mxu0 0.0
  %872 = vmatpush2.msra.mxu0 0.0
  %873 = vmatprep.subr.mxu0 0.0
  %874 = vmatpush2.msra.mxu0 0.0
  %875 = vmatprep.subr.mxu0 0.0
  %876 = vmatpush2.msra.mxu0 0.0
  %877 = vmatprep.mubr.f32.mxu0 0.0
  %878 = vmatmul.mubr.f32.gmra.mxu0 %v811
  %v879 = vpop.f32.mrf.mxu0
  %v880 = vadd.f32 %v250, %v879
  %v881 = vpop.f32.mrf.mxu0
  %882 = vdwg.mxu0
  %883 = vst.msk [vmem:[%s7 + $0x6] sm:$0x3] %vm327, %v880
  %884 = vmatprep.subr.mxu0 0.0
  %885 = vmatpush1.msra.mxu0 0.0
  %886 = vmatprep.subr.mxu0 0.0
  %887 = vmatpush1.msra.mxu0 0.0
  %888 = vmatprep.subr.mxu0 0.0
  %889 = vmatpush1.msra.mxu0 0.0
  %890 = vmatprep.subr.mxu0 0.0
  %891 = vmatpush1.msra.mxu0 0.0
  %892 = vmatprep.subr.mxu0 0.0
  %893 = vmatpush1.msra.mxu0 0.0
  %894 = vmatprep.subr.mxu0 0.0
  %895 = vmatpush1.msra.mxu0 0.0
  %896 = vmatprep.subr.mxu0 0.0
  %897 = vmatpush1.msra.mxu0 0.0
  %898 = vmatprep.subr.mxu0 0.0
  %899 = vmatpush1.msra.mxu0 0.0
  %900 = vmatprep.subr.mxu0 0.0
  %901 = vmatpush1.msra.mxu0 0.0
  %902 = vmatprep.subr.mxu0 0.0
  %903 = vmatpush1.msra.mxu0 0.0
  %904 = vmatprep.subr.mxu0 0.0
  %905 = vmatpush1.msra.mxu0 0.0
  %906 = vmatprep.subr.mxu0 0.0
  %907 = vmatpush1.msra.mxu0 0.0
  %908 = vmatprep.subr.mxu0 0.0
  %909 = vmatpush1.msra.mxu0 %v127
  %910 = vmatprep.subr.mxu0 0.0
  %911 = vmatpush1.msra.mxu0 %v126
  %912 = vmatprep.subr.mxu0 0.0
  %913 = vmatpush1.msra.mxu0 %v125
  %914 = vmatprep.subr.mxu0 0.0
  %915 = vmatpush1.msra.mxu0 %v124
  %916 = vmatprep.subr.mxu0 0.0
  %917 = vmatpush2.msra.mxu0 0.0
  %918 = vmatprep.subr.mxu0 0.0
  %919 = vmatpush2.msra.mxu0 0.0
  %920 = vmatprep.subr.mxu0 0.0
  %921 = vmatpush2.msra.mxu0 0.0
  %922 = vmatprep.subr.mxu0 0.0
  %923 = vmatpush2.msra.mxu0 0.0
  %924 = vmatprep.subr.mxu0 0.0
  %925 = vmatpush2.msra.mxu0 0.0
  %926 = vmatprep.subr.mxu0 0.0
  %927 = vmatpush2.msra.mxu0 0.0
  %928 = vmatprep.subr.mxu0 0.0
  %929 = vmatpush2.msra.mxu0 0.0
  %930 = vmatprep.subr.mxu0 0.0
  %931 = vmatpush2.msra.mxu0 0.0
  %932 = vmatprep.subr.mxu0 0.0
  %933 = vmatpush2.msra.mxu0 0.0
  %934 = vmatprep.subr.mxu0 0.0
  %935 = vmatpush2.msra.mxu0 0.0
  %936 = vmatprep.subr.mxu0 0.0
  %937 = vmatpush2.msra.mxu0 0.0
  %938 = vmatprep.subr.mxu0 0.0
  %939 = vmatpush2.msra.mxu0 0.0
  %940 = vmatprep.subr.mxu0 0.0
  %941 = vmatpush2.msra.mxu0 0.0
  %942 = vmatprep.subr.mxu0 0.0
  %943 = vmatpush2.msra.mxu0 0.0
  %944 = vmatprep.subr.mxu0 0.0
  %945 = vmatpush2.msra.mxu0 0.0
  %946 = vmatprep.subr.mxu0 0.0
  %947 = vmatpush2.msra.mxu0 0.0
  %948 = vmatprep.mubr.f32.mxu0 0.0
  %949 = vmatmul.mubr.f32.gmra.mxu0 %v811
  %v950 = vpop.f32.mrf.mxu0
  %v951 = vadd.f32 0.0, %v950
  %v952 = vpop.f32.mrf.mxu0
  %953 = vdwg.mxu0
  %v954 = vadd.f32 %v121, %v951
  %v955 = vxor.u32 %v954, 2147483648
  %v956 = vmul.f32 %v955, 1.442695
  %v957 = vpow.pop %v956
  %v958 = vadd.f32 %v957, 1.0
  %v959 = vrcp.pop %v958
  %v960 = vmul.f32 1.0, %v959
  %v961 = vadd.f32 %v951, %v221
  %963 = vrot.lane.b32.xlu0 %v961, 64
  %v964 = vpop.permute.xlu0 %963
  %v966 = vmul.f32 %v960, %v964
  %968 = vrot.lane.b32.xlu0 %v966, 64
  %v969 = vpop.permute.xlu0 %968
  %v971 = vadd.f32 %v121, %v969
  %v972 = vtanh.pop %v971
  %v974 = vrot.slane %v972, 2
  %v976 = vsub.f32 %v806, %v974
  %v978 = vrot.slane %v976, 6
  %979 = vrot.lane.b32.xlu0 %v978, 96
  %v980 = vpop.permute.xlu0 %979
  %v982 = vmul.f32 %v960, %v980
  %984 = vrot.lane.b32.xlu0 %v982, 32
  %v985 = vpop.permute.xlu0 %984
  %v987 = vadd.f32 %v972, %v985
  %989 = vrot.lane.b32.xlu0 %v987, 64
  %v990 = vpop.permute.xlu0 %989
  %v991 = vsel %vm139, %v990, 0
  %993 = vmatprep.subr.mxu0 0.0
  %994 = vmatpush1.msra.mxu0 0.0
  %995 = vmatprep.subr.mxu0 0.0
  %996 = vmatpush1.msra.mxu0 0.0
  %997 = vmatprep.subr.mxu0 0.0
  %998 = vmatpush1.msra.mxu0 0.0
  %999 = vmatprep.subr.mxu0 0.0
  %1000 = vmatpush1.msra.mxu0 0.0
  %1001 = vmatprep.subr.mxu0 0.0
  %1002 = vmatpush1.msra.mxu0 0.0
  %1003 = vmatprep.subr.mxu0 0.0
  %1004 = vmatpush1.msra.mxu0 0.0
  %1005 = vmatprep.subr.mxu0 0.0
  %1006 = vmatpush1.msra.mxu0 0.0
  %1007 = vmatprep.subr.mxu0 0.0
  %1008 = vmatpush1.msra.mxu0 0.0
  %1009 = vmatprep.subr.mxu0 0.0
  %1010 = vmatpush1.msra.mxu0 0.0
  %1011 = vmatprep.subr.mxu0 0.0
  %1012 = vmatpush1.msra.mxu0 0.0
  %1013 = vmatprep.subr.mxu0 0.0
  %1014 = vmatpush1.msra.mxu0 0.0
  %1015 = vmatprep.subr.mxu0 0.0
  %1016 = vmatpush1.msra.mxu0 0.0
  %1017 = vmatprep.subr.mxu0 0.0
  %1018 = vmatpush1.msra.mxu0 %v131
  %1019 = vmatprep.subr.mxu0 0.0
  %1020 = vmatpush1.msra.mxu0 %v130
  %1021 = vmatprep.subr.mxu0 0.0
  %1022 = vmatpush1.msra.mxu0 %v129
  %1023 = vmatprep.subr.mxu0 0.0
  %1024 = vmatpush1.msra.mxu0 %v128
  %1025 = vmatprep.subr.mxu0 0.0
  %1026 = vmatpush2.msra.mxu0 0.0
  %1027 = vmatprep.subr.mxu0 0.0
  %1028 = vmatpush2.msra.mxu0 0.0
  %1029 = vmatprep.subr.mxu0 0.0
  %1030 = vmatpush2.msra.mxu0 0.0
  %1031 = vmatprep.subr.mxu0 0.0
  %1032 = vmatpush2.msra.mxu0 0.0
  %1033 = vmatprep.subr.mxu0 0.0
  %1034 = vmatpush2.msra.mxu0 0.0
  %1035 = vmatprep.subr.mxu0 0.0
  %1036 = vmatpush2.msra.mxu0 0.0
  %1037 = vmatprep.subr.mxu0 0.0
  %1038 = vmatpush2.msra.mxu0 0.0
  %1039 = vmatprep.subr.mxu0 0.0
  %1040 = vmatpush2.msra.mxu0 0.0
  %1041 = vmatprep.subr.mxu0 0.0
  %1042 = vmatpush2.msra.mxu0 0.0
  %1043 = vmatprep.subr.mxu0 0.0
  %1044 = vmatpush2.msra.mxu0 0.0
  %1045 = vmatprep.subr.mxu0 0.0
  %1046 = vmatpush2.msra.mxu0 0.0
  %1047 = vmatprep.subr.mxu0 0.0
  %1048 = vmatpush2.msra.mxu0 0.0
  %1049 = vmatprep.subr.mxu0 0.0
  %1050 = vmatpush2.msra.mxu0 0.0
  %1051 = vmatprep.subr.mxu0 0.0
  %1052 = vmatpush2.msra.mxu0 0.0
  %1053 = vmatprep.subr.mxu0 0.0
  %1054 = vmatpush2.msra.mxu0 0.0
  %1055 = vmatprep.subr.mxu0 0.0
  %1056 = vmatpush2.msra.mxu0 0.0
  %1057 = vmatprep.mubr.f32.mxu0 0.0
  %1058 = vmatmul.mubr.f32.gmra.mxu0 %v991
  %v1059 = vpop.f32.mrf.mxu0
  %v1060 = vadd.f32 %v250, %v1059
  %v1061 = vpop.f32.mrf.mxu0
  %1062 = vdwg.mxu0
  %1063 = vst.msk [vmem:[%s7 + $0x8] sm:$0x3] %vm327, %v1060
  %1064 = vmatprep.subr.mxu0 0.0
  %1065 = vmatpush1.msra.mxu0 0.0
  %1066 = vmatprep.subr.mxu0 0.0
  %1067 = vmatpush1.msra.mxu0 0.0
  %1068 = vmatprep.subr.mxu0 0.0
  %1069 = vmatpush1.msra.mxu0 0.0
  %1070 = vmatprep.subr.mxu0 0.0
  %1071 = vmatpush1.msra.mxu0 0.0
  %1072 = vmatprep.subr.mxu0 0.0
  %1073 = vmatpush1.msra.mxu0 0.0
  %1074 = vmatprep.subr.mxu0 0.0
  %1075 = vmatpush1.msra.mxu0 0.0
  %1076 = vmatprep.subr.mxu0 0.0
  %1077 = vmatpush1.msra.mxu0 0.0
  %1078 = vmatprep.subr.mxu0 0.0
  %1079 = vmatpush1.msra.mxu0 0.0
  %1080 = vmatprep.subr.mxu0 0.0
  %1081 = vmatpush1.msra.mxu0 0.0
  %1082 = vmatprep.subr.mxu0 0.0
  %1083 = vmatpush1.msra.mxu0 0.0
  %1084 = vmatprep.subr.mxu0 0.0
  %1085 = vmatpush1.msra.mxu0 0.0
  %1086 = vmatprep.subr.mxu0 0.0
  %1087 = vmatpush1.msra.mxu0 0.0
  %1088 = vmatprep.subr.mxu0 0.0
  %1089 = vmatpush1.msra.mxu0 %v127
  %1090 = vmatprep.subr.mxu0 0.0
  %1091 = vmatpush1.msra.mxu0 %v126
  %1092 = vmatprep.subr.mxu0 0.0
  %1093 = vmatpush1.msra.mxu0 %v125
  %1094 = vmatprep.subr.mxu0 0.0
  %1095 = vmatpush1.msra.mxu0 %v124
  %1096 = vmatprep.subr.mxu0 0.0
  %1097 = vmatpush2.msra.mxu0 0.0
  %1098 = vmatprep.subr.mxu0 0.0
  %1099 = vmatpush2.msra.mxu0 0.0
  %1100 = vmatprep.subr.mxu0 0.0
  %1101 = vmatpush2.msra.mxu0 0.0
  %1102 = vmatprep.subr.mxu0 0.0
  %1103 = vmatpush2.msra.mxu0 0.0
  %1104 = vmatprep.subr.mxu0 0.0
  %1105 = vmatpush2.msra.mxu0 0.0
  %1106 = vmatprep.subr.mxu0 0.0
  %1107 = vmatpush2.msra.mxu0 0.0
  %1108 = vmatprep.subr.mxu0 0.0
  %1109 = vmatpush2.msra.mxu0 0.0
  %1110 = vmatprep.subr.mxu0 0.0
  %1111 = vmatpush2.msra.mxu0 0.0
  %1112 = vmatprep.subr.mxu0 0.0
  %1113 = vmatpush2.msra.mxu0 0.0
  %1114 = vmatprep.subr.mxu0 0.0
  %1115 = vmatpush2.msra.mxu0 0.0
  %1116 = vmatprep.subr.mxu0 0.0
  %1117 = vmatpush2.msra.mxu0 0.0
  %1118 = vmatprep.subr.mxu0 0.0
  %1119 = vmatpush2.msra.mxu0 0.0
  %1120 = vmatprep.subr.mxu0 0.0
  %1121 = vmatpush2.msra.mxu0 0.0
  %1122 = vmatprep.subr.mxu0 0.0
  %1123 = vmatpush2.msra.mxu0 0.0
  %1124 = vmatprep.subr.mxu0 0.0
  %1125 = vmatpush2.msra.mxu0 0.0
  %1126 = vmatprep.subr.mxu0 0.0
  %1127 = vmatpush2.msra.mxu0 0.0
  %1128 = vmatprep.mubr.f32.mxu0 0.0
  %1129 = vmatmul.mubr.f32.gmra.mxu0 %v991
  %v1130 = vpop.f32.mrf.mxu0
  %v1131 = vadd.f32 0.0, %v1130
  %v1132 = vpop.f32.mrf.mxu0
  %1133 = vdwg.mxu0
  %v1135 = vrot.slane %v1131, 6
  %v1137 = vadd.f32 %v121, %v1135
  %v1138 = vxor.u32 %v1137, 2147483648
  %v1139 = vmul.f32 %v1138, 1.442695
  %v1140 = vpow.pop %v1139
  %v1141 = vadd.f32 %v1140, 1.0
  %v1142 = vrcp.pop %v1141
  %v1143 = vmul.f32 1.0, %v1142
  %v1144 = vadd.f32 %v1131, %v221
  %v1146 = vrot.slane %v1144, 6
  %1147 = vrot.lane.b32.xlu0 %v1146, 64
  %v1148 = vpop.permute.xlu0 %1147
  %v1150 = vmul.f32 %v1143, %v1148
  %1152 = vrot.lane.b32.xlu0 %v1150, 64
  %v1153 = vpop.permute.xlu0 %1152
  %v1155 = vadd.f32 %v121, %v1153
  %v1156 = vtanh.pop %v1155
  %v1158 = vrot.slane %v1156, 2
  %v1160 = vsub.f32 %v987, %v1158
  %v1162 = vrot.slane %v1160, 6
  %1163 = vrot.lane.b32.xlu0 %v1162, 96
  %v1164 = vpop.permute.xlu0 %1163
  %v1166 = vmul.f32 %v1143, %v1164
  %1168 = vrot.lane.b32.xlu0 %v1166, 32
  %v1169 = vpop.permute.xlu0 %1168
  %v1171 = vadd.f32 %v1156, %v1169
  %v1173 = vrot.slane %v1171, 2
  %1174 = vrot.lane.b32.xlu0 %v1173, 64
  %v1175 = vpop.permute.xlu0 %1174
  %v1176 = vsel %vm139, %v1175, 0
  %1178 = vmatprep.subr.mxu0 0.0
  %1179 = vmatpush1.msra.mxu0 0.0
  %1180 = vmatprep.subr.mxu0 0.0
  %1181 = vmatpush1.msra.mxu0 0.0
  %1182 = vmatprep.subr.mxu0 0.0
  %1183 = vmatpush1.msra.mxu0 0.0
  %1184 = vmatprep.subr.mxu0 0.0
  %1185 = vmatpush1.msra.mxu0 0.0
  %1186 = vmatprep.subr.mxu0 0.0
  %1187 = vmatpush1.msra.mxu0 0.0
  %1188 = vmatprep.subr.mxu0 0.0
  %1189 = vmatpush1.msra.mxu0 0.0
  %1190 = vmatprep.subr.mxu0 0.0
  %1191 = vmatpush1.msra.mxu0 0.0
  %1192 = vmatprep.subr.mxu0 0.0
  %1193 = vmatpush1.msra.mxu0 0.0
  %1194 = vmatprep.subr.mxu0 0.0
  %1195 = vmatpush1.msra.mxu0 0.0
  %1196 = vmatprep.subr.mxu0 0.0
  %1197 = vmatpush1.msra.mxu0 0.0
  %1198 = vmatprep.subr.mxu0 0.0
  %1199 = vmatpush1.msra.mxu0 0.0
  %1200 = vmatprep.subr.mxu0 0.0
  %1201 = vmatpush1.msra.mxu0 0.0
  %1202 = vmatprep.subr.mxu0 0.0
  %1203 = vmatpush1.msra.mxu0 %v131
  %1204 = vmatprep.subr.mxu0 0.0
  %1205 = vmatpush1.msra.mxu0 %v130
  %1206 = vmatprep.subr.mxu0 0.0
  %1207 = vmatpush1.msra.mxu0 %v129
  %1208 = vmatprep.subr.mxu0 0.0
  %1209 = vmatpush1.msra.mxu0 %v128
  %1210 = vmatprep.subr.mxu0 0.0
  %1211 = vmatpush2.msra.mxu0 0.0
  %1212 = vmatprep.subr.mxu0 0.0
  %1213 = vmatpush2.msra.mxu0 0.0
  %1214 = vmatprep.subr.mxu0 0.0
  %1215 = vmatpush2.msra.mxu0 0.0
  %1216 = vmatprep.subr.mxu0 0.0
  %1217 = vmatpush2.msra.mxu0 0.0
  %1218 = vmatprep.subr.mxu0 0.0
  %1219 = vmatpush2.msra.mxu0 0.0
  %1220 = vmatprep.subr.mxu0 0.0
  %1221 = vmatpush2.msra.mxu0 0.0
  %1222 = vmatprep.subr.mxu0 0.0
  %1223 = vmatpush2.msra.mxu0 0.0
  %1224 = vmatprep.subr.mxu0 0.0
  %1225 = vmatpush2.msra.mxu0 0.0
  %1226 = vmatprep.subr.mxu0 0.0
  %1227 = vmatpush2.msra.mxu0 0.0
  %1228 = vmatprep.subr.mxu0 0.0
  %1229 = vmatpush2.msra.mxu0 0.0
  %1230 = vmatprep.subr.mxu0 0.0
  %1231 = vmatpush2.msra.mxu0 0.0
  %1232 = vmatprep.subr.mxu0 0.0
  %1233 = vmatpush2.msra.mxu0 0.0
  %1234 = vmatprep.subr.mxu0 0.0
  %1235 = vmatpush2.msra.mxu0 0.0
  %1236 = vmatprep.subr.mxu0 0.0
  %1237 = vmatpush2.msra.mxu0 0.0
  %1238 = vmatprep.subr.mxu0 0.0
  %1239 = vmatpush2.msra.mxu0 0.0
  %1240 = vmatprep.subr.mxu0 0.0
  %1241 = vmatpush2.msra.mxu0 0.0
  %1242 = vmatprep.mubr.f32.mxu0 0.0
  %1243 = vmatmul.mubr.f32.gmra.mxu0 %v1176
  %v1244 = vpop.f32.mrf.mxu0
  %v1245 = vadd.f32 %v250, %v1244
  %v1246 = vpop.f32.mrf.mxu0
  %1247 = vdwg.mxu0
  %1248 = vst.msk [vmem:[%s7 + $0xa] sm:$0x3] %vm327, %v1245
  %1249 = vmatprep.subr.mxu0 0.0
  %1250 = vmatpush1.msra.mxu0 0.0
  %1251 = vmatprep.subr.mxu0 0.0
  %1252 = vmatpush1.msra.mxu0 0.0
  %1253 = vmatprep.subr.mxu0 0.0
  %1254 = vmatpush1.msra.mxu0 0.0
  %1255 = vmatprep.subr.mxu0 0.0
  %1256 = vmatpush1.msra.mxu0 0.0
  %1257 = vmatprep.subr.mxu0 0.0
  %1258 = vmatpush1.msra.mxu0 0.0
  %1259 = vmatprep.subr.mxu0 0.0
  %1260 = vmatpush1.msra.mxu0 0.0
  %1261 = vmatprep.subr.mxu0 0.0
  %1262 = vmatpush1.msra.mxu0 0.0
  %1263 = vmatprep.subr.mxu0 0.0
  %1264 = vmatpush1.msra.mxu0 0.0
  %1265 = vmatprep.subr.mxu0 0.0
  %1266 = vmatpush1.msra.mxu0 0.0
  %1267 = vmatprep.subr.mxu0 0.0
  %1268 = vmatpush1.msra.mxu0 0.0
  %1269 = vmatprep.subr.mxu0 0.0
  %1270 = vmatpush1.msra.mxu0 0.0
  %1271 = vmatprep.subr.mxu0 0.0
  %1272 = vmatpush1.msra.mxu0 0.0
  %1273 = vmatprep.subr.mxu0 0.0
  %1274 = vmatpush1.msra.mxu0 %v127
  %1275 = vmatprep.subr.mxu0 0.0
  %1276 = vmatpush1.msra.mxu0 %v126
  %1277 = vmatprep.subr.mxu0 0.0
  %1278 = vmatpush1.msra.mxu0 %v125
  %1279 = vmatprep.subr.mxu0 0.0
  %1280 = vmatpush1.msra.mxu0 %v124
  %1281 = vmatprep.subr.mxu0 0.0
  %1282 = vmatpush2.msra.mxu0 0.0
  %1283 = vmatprep.subr.mxu0 0.0
  %1284 = vmatpush2.msra.mxu0 0.0
  %1285 = vmatprep.subr.mxu0 0.0
  %1286 = vmatpush2.msra.mxu0 0.0
  %1287 = vmatprep.subr.mxu0 0.0
  %1288 = vmatpush2.msra.mxu0 0.0
  %1289 = vmatprep.subr.mxu0 0.0
  %1290 = vmatpush2.msra.mxu0 0.0
  %1291 = vmatprep.subr.mxu0 0.0
  %1292 = vmatpush2.msra.mxu0 0.0
  %1293 = vmatprep.subr.mxu0 0.0
  %1294 = vmatpush2.msra.mxu0 0.0
  %1295 = vmatprep.subr.mxu0 0.0
  %1296 = vmatpush2.msra.mxu0 0.0
  %1297 = vmatprep.subr.mxu0 0.0
  %1298 = vmatpush2.msra.mxu0 0.0
  %1299 = vmatprep.subr.mxu0 0.0
  %1300 = vmatpush2.msra.mxu0 0.0
  %1301 = vmatprep.subr.mxu0 0.0
  %1302 = vmatpush2.msra.mxu0 0.0
  %1303 = vmatprep.subr.mxu0 0.0
  %1304 = vmatpush2.msra.mxu0 0.0
  %1305 = vmatprep.subr.mxu0 0.0
  %1306 = vmatpush2.msra.mxu0 0.0
  %1307 = vmatprep.subr.mxu0 0.0
  %1308 = vmatpush2.msra.mxu0 0.0
  %1309 = vmatprep.subr.mxu0 0.0
  %1310 = vmatpush2.msra.mxu0 0.0
  %1311 = vmatprep.subr.mxu0 0.0
  %1312 = vmatpush2.msra.mxu0 0.0
  %1313 = vmatprep.mubr.f32.mxu0 0.0
  %1314 = vmatmul.mubr.f32.gmra.mxu0 %v1176
  %v1315 = vpop.f32.mrf.mxu0
  %v1316 = vadd.f32 0.0, %v1315
  %v1317 = vpop.f32.mrf.mxu0
  %1318 = vdwg.mxu0
  %v1320 = vrot.slane %v1316, 4
  %v1322 = vadd.f32 %v121, %v1320
  %v1323 = vxor.u32 %v1322, 2147483648
  %v1324 = vmul.f32 %v1323, 1.442695
  %v1325 = vpow.pop %v1324
  %v1326 = vadd.f32 %v1325, 1.0
  %v1327 = vrcp.pop %v1326
  %v1328 = vmul.f32 1.0, %v1327
  %v1329 = vadd.f32 %v1316, %v221
  %v1331 = vrot.slane %v1329, 4
  %1332 = vrot.lane.b32.xlu0 %v1331, 64
  %v1333 = vpop.permute.xlu0 %1332
  %v1335 = vmul.f32 %v1328, %v1333
  %1337 = vrot.lane.b32.xlu0 %v1335, 64
  %v1338 = vpop.permute.xlu0 %1337
  %v1340 = vadd.f32 %v121, %v1338
  %v1341 = vtanh.pop %v1340
  %v1343 = vrot.slane %v1341, 2
  %v1345 = vsub.f32 %v1171, %v1343
  %v1347 = vrot.slane %v1345, 6
  %1348 = vrot.lane.b32.xlu0 %v1347, 96
  %v1349 = vpop.permute.xlu0 %1348
  %v1351 = vmul.f32 %v1328, %v1349
  %1353 = vrot.lane.b32.xlu0 %v1351, 32
  %v1354 = vpop.permute.xlu0 %1353
  %v1356 = vadd.f32 %v1341, %v1354
  %v1358 = vrot.slane %v1356, 4
  %1359 = vrot.lane.b32.xlu0 %v1358, 64
  %v1360 = vpop.permute.xlu0 %1359
  %v1361 = vsel %vm139, %v1360, 0
  %1363 = vmatprep.subr.mxu0 0.0
  %1364 = vmatpush1.msra.mxu0 0.0
  %1365 = vmatprep.subr.mxu0 0.0
  %1366 = vmatpush1.msra.mxu0 0.0
  %1367 = vmatprep.subr.mxu0 0.0
  %1368 = vmatpush1.msra.mxu0 0.0
  %1369 = vmatprep.subr.mxu0 0.0
  %1370 = vmatpush1.msra.mxu0 0.0
  %1371 = vmatprep.subr.mxu0 0.0
  %1372 = vmatpush1.msra.mxu0 0.0
  %1373 = vmatprep.subr.mxu0 0.0
  %1374 = vmatpush1.msra.mxu0 0.0
  %1375 = vmatprep.subr.mxu0 0.0
  %1376 = vmatpush1.msra.mxu0 0.0
  %1377 = vmatprep.subr.mxu0 0.0
  %1378 = vmatpush1.msra.mxu0 0.0
  %1379 = vmatprep.subr.mxu0 0.0
  %1380 = vmatpush1.msra.mxu0 0.0
  %1381 = vmatprep.subr.mxu0 0.0
  %1382 = vmatpush1.msra.mxu0 0.0
  %1383 = vmatprep.subr.mxu0 0.0
  %1384 = vmatpush1.msra.mxu0 0.0
  %1385 = vmatprep.subr.mxu0 0.0
  %1386 = vmatpush1.msra.mxu0 0.0
  %1387 = vmatprep.subr.mxu0 0.0
  %1388 = vmatpush1.msra.mxu0 %v131
  %1389 = vmatprep.subr.mxu0 0.0
  %1390 = vmatpush1.msra.mxu0 %v130
  %1391 = vmatprep.subr.mxu0 0.0
  %1392 = vmatpush1.msra.mxu0 %v129
  %1393 = vmatprep.subr.mxu0 0.0
  %1394 = vmatpush1.msra.mxu0 %v128
  %1395 = vmatprep.subr.mxu0 0.0
  %1396 = vmatpush2.msra.mxu0 0.0
  %1397 = vmatprep.subr.mxu0 0.0
  %1398 = vmatpush2.msra.mxu0 0.0
  %1399 = vmatprep.subr.mxu0 0.0
  %1400 = vmatpush2.msra.mxu0 0.0
  %1401 = vmatprep.subr.mxu0 0.0
  %1402 = vmatpush2.msra.mxu0 0.0
  %1403 = vmatprep.subr.mxu0 0.0
  %1404 = vmatpush2.msra.mxu0 0.0
  %1405 = vmatprep.subr.mxu0 0.0
  %1406 = vmatpush2.msra.mxu0 0.0
  %1407 = vmatprep.subr.mxu0 0.0
  %1408 = vmatpush2.msra.mxu0 0.0
  %1409 = vmatprep.subr.mxu0 0.0
  %1410 = vmatpush2.msra.mxu0 0.0
  %1411 = vmatprep.subr.mxu0 0.0
  %1412 = vmatpush2.msra.mxu0 0.0
  %1413 = vmatprep.subr.mxu0 0.0
  %1414 = vmatpush2.msra.mxu0 0.0
  %1415 = vmatprep.subr.mxu0 0.0
  %1416 = vmatpush2.msra.mxu0 0.0
  %1417 = vmatprep.subr.mxu0 0.0
  %1418 = vmatpush2.msra.mxu0 0.0
  %1419 = vmatprep.subr.mxu0 0.0
  %1420 = vmatpush2.msra.mxu0 0.0
  %1421 = vmatprep.subr.mxu0 0.0
  %1422 = vmatpush2.msra.mxu0 0.0
  %1423 = vmatprep.subr.mxu0 0.0
  %1424 = vmatpush2.msra.mxu0 0.0
  %1425 = vmatprep.subr.mxu0 0.0
  %1426 = vmatpush2.msra.mxu0 0.0
  %1427 = vmatprep.mubr.f32.mxu0 0.0
  %1428 = vmatmul.mubr.f32.gmra.mxu0 %v1361
  %v1429 = vpop.f32.mrf.mxu0
  %v1430 = vadd.f32 %v250, %v1429
  %v1431 = vpop.f32.mrf.mxu0
  %1432 = vdwg.mxu0
  %1433 = vst.msk [vmem:[%s7 + $0xc] sm:$0x3] %vm327, %v1430
  %1434 = vmatprep.subr.mxu0 0.0
  %1435 = vmatpush1.msra.mxu0 0.0
  %1436 = vmatprep.subr.mxu0 0.0
  %1437 = vmatpush1.msra.mxu0 0.0
  %1438 = vmatprep.subr.mxu0 0.0
  %1439 = vmatpush1.msra.mxu0 0.0
  %1440 = vmatprep.subr.mxu0 0.0
  %1441 = vmatpush1.msra.mxu0 0.0
  %1442 = vmatprep.subr.mxu0 0.0
  %1443 = vmatpush1.msra.mxu0 0.0
  %1444 = vmatprep.subr.mxu0 0.0
  %1445 = vmatpush1.msra.mxu0 0.0
  %1446 = vmatprep.subr.mxu0 0.0
  %1447 = vmatpush1.msra.mxu0 0.0
  %1448 = vmatprep.subr.mxu0 0.0
  %1449 = vmatpush1.msra.mxu0 0.0
  %1450 = vmatprep.subr.mxu0 0.0
  %1451 = vmatpush1.msra.mxu0 0.0
  %1452 = vmatprep.subr.mxu0 0.0
  %1453 = vmatpush1.msra.mxu0 0.0
  %1454 = vmatprep.subr.mxu0 0.0
  %1455 = vmatpush1.msra.mxu0 0.0
  %1456 = vmatprep.subr.mxu0 0.0
  %1457 = vmatpush1.msra.mxu0 0.0
  %1458 = vmatprep.subr.mxu0 0.0
  %1459 = vmatpush1.msra.mxu0 %v127
  %1460 = vmatprep.subr.mxu0 0.0
  %1461 = vmatpush1.msra.mxu0 %v126
  %1462 = vmatprep.subr.mxu0 0.0
  %1463 = vmatpush1.msra.mxu0 %v125
  %1464 = vmatprep.subr.mxu0 0.0
  %1465 = vmatpush1.msra.mxu0 %v124
  %1466 = vmatprep.subr.mxu0 0.0
  %1467 = vmatpush2.msra.mxu0 0.0
  %1468 = vmatprep.subr.mxu0 0.0
  %1469 = vmatpush2.msra.mxu0 0.0
  %1470 = vmatprep.subr.mxu0 0.0
  %1471 = vmatpush2.msra.mxu0 0.0
  %1472 = vmatprep.subr.mxu0 0.0
  %1473 = vmatpush2.msra.mxu0 0.0
  %1474 = vmatprep.subr.mxu0 0.0
  %1475 = vmatpush2.msra.mxu0 0.0
  %1476 = vmatprep.subr.mxu0 0.0
  %1477 = vmatpush2.msra.mxu0 0.0
  %1478 = vmatprep.subr.mxu0 0.0
  %1479 = vmatpush2.msra.mxu0 0.0
  %1480 = vmatprep.subr.mxu0 0.0
  %1481 = vmatpush2.msra.mxu0 0.0
  %1482 = vmatprep.subr.mxu0 0.0
  %1483 = vmatpush2.msra.mxu0 0.0
  %1484 = vmatprep.subr.mxu0 0.0
  %1485 = vmatpush2.msra.mxu0 0.0
  %1486 = vmatprep.subr.mxu0 0.0
  %1487 = vmatpush2.msra.mxu0 0.0
  %1488 = vmatprep.subr.mxu0 0.0
  %1489 = vmatpush2.msra.mxu0 0.0
  %1490 = vmatprep.subr.mxu0 0.0
  %1491 = vmatpush2.msra.mxu0 0.0
  %1492 = vmatprep.subr.mxu0 0.0
  %1493 = vmatpush2.msra.mxu0 0.0
  %1494 = vmatprep.subr.mxu0 0.0
  %1495 = vmatpush2.msra.mxu0 0.0
  %1496 = vmatprep.subr.mxu0 0.0
  %1497 = vmatpush2.msra.mxu0 0.0
  %1498 = vmatprep.mubr.f32.mxu0 0.0
  %1499 = vmatmul.mubr.f32.gmra.mxu0 %v1361
  %v1500 = vpop.f32.mrf.mxu0
  %v1501 = vadd.f32 0.0, %v1500
  %v1502 = vpop.f32.mrf.mxu0
  %1503 = vdwg.mxu0
  %v1505 = vrot.slane %v1501, 2
  %v1507 = vadd.f32 %v121, %v1505
  %v1508 = vxor.u32 %v1507, 2147483648
  %v1509 = vmul.f32 %v1508, 1.442695
  %v1510 = vpow.pop %v1509
  %v1511 = vadd.f32 %v1510, 1.0
  %v1512 = vrcp.pop %v1511
  %v1513 = vmul.f32 1.0, %v1512
  %v1514 = vadd.f32 %v1501, %v221
  %v1516 = vrot.slane %v1514, 2
  %1517 = vrot.lane.b32.xlu0 %v1516, 64
  %v1518 = vpop.permute.xlu0 %1517
  %v1520 = vmul.f32 %v1513, %v1518
  %1522 = vrot.lane.b32.xlu0 %v1520, 64
  %v1523 = vpop.permute.xlu0 %1522
  %v1525 = vadd.f32 %v121, %v1523
  %v1526 = vtanh.pop %v1525
  %v1528 = vrot.slane %v1526, 2
  %v1530 = vsub.f32 %v1356, %v1528
  %v1532 = vrot.slane %v1530, 6
  %1533 = vrot.lane.b32.xlu0 %v1532, 96
  %v1534 = vpop.permute.xlu0 %1533
  %v1536 = vmul.f32 %v1513, %v1534
  %1538 = vrot.lane.b32.xlu0 %v1536, 32
  %v1539 = vpop.permute.xlu0 %1538
  %v1541 = vadd.f32 %v1526, %v1539
  %v1543 = vrot.slane %v1541, 6
  %1544 = vrot.lane.b32.xlu0 %v1543, 64
  %v1545 = vpop.permute.xlu0 %1544
  %v1546 = vsel %vm139, %v1545, 0
  %1548 = vmatprep.subr.mxu0 0.0
  %1549 = vmatpush1.msra.mxu0 0.0
  %1550 = vmatprep.subr.mxu0 0.0
  %1551 = vmatpush1.msra.mxu0 0.0
  %1552 = vmatprep.subr.mxu0 0.0
  %1553 = vmatpush1.msra.mxu0 0.0
  %1554 = vmatprep.subr.mxu0 0.0
  %1555 = vmatpush1.msra.mxu0 0.0
  %1556 = vmatprep.subr.mxu0 0.0
  %1557 = vmatpush1.msra.mxu0 0.0
  %1558 = vmatprep.subr.mxu0 0.0
  %1559 = vmatpush1.msra.mxu0 0.0
  %1560 = vmatprep.subr.mxu0 0.0
  %1561 = vmatpush1.msra.mxu0 0.0
  %1562 = vmatprep.subr.mxu0 0.0
  %1563 = vmatpush1.msra.mxu0 0.0
  %1564 = vmatprep.subr.mxu0 0.0
  %1565 = vmatpush1.msra.mxu0 0.0
  %1566 = vmatprep.subr.mxu0 0.0
  %1567 = vmatpush1.msra.mxu0 0.0
  %1568 = vmatprep.subr.mxu0 0.0
  %1569 = vmatpush1.msra.mxu0 0.0
  %1570 = vmatprep.subr.mxu0 0.0
  %1571 = vmatpush1.msra.mxu0 0.0
  %1572 = vmatprep.subr.mxu0 0.0
  %1573 = vmatpush1.msra.mxu0 %v131
  %1574 = vmatprep.subr.mxu0 0.0
  %1575 = vmatpush1.msra.mxu0 %v130
  %1576 = vmatprep.subr.mxu0 0.0
  %1577 = vmatpush1.msra.mxu0 %v129
  %1578 = vmatprep.subr.mxu0 0.0
  %1579 = vmatpush1.msra.mxu0 %v128
  %1580 = vmatprep.subr.mxu0 0.0
  %1581 = vmatpush2.msra.mxu0 0.0
  %1582 = vmatprep.subr.mxu0 0.0
  %1583 = vmatpush2.msra.mxu0 0.0
  %1584 = vmatprep.subr.mxu0 0.0
  %1585 = vmatpush2.msra.mxu0 0.0
  %1586 = vmatprep.subr.mxu0 0.0
  %1587 = vmatpush2.msra.mxu0 0.0
  %1588 = vmatprep.subr.mxu0 0.0
  %1589 = vmatpush2.msra.mxu0 0.0
  %1590 = vmatprep.subr.mxu0 0.0
  %1591 = vmatpush2.msra.mxu0 0.0
  %1592 = vmatprep.subr.mxu0 0.0
  %1593 = vmatpush2.msra.mxu0 0.0
  %1594 = vmatprep.subr.mxu0 0.0
  %1595 = vmatpush2.msra.mxu0 0.0
  %1596 = vmatprep.subr.mxu0 0.0
  %1597 = vmatpush2.msra.mxu0 0.0
  %1598 = vmatprep.subr.mxu0 0.0
  %1599 = vmatpush2.msra.mxu0 0.0
  %1600 = vmatprep.subr.mxu0 0.0
  %1601 = vmatpush2.msra.mxu0 0.0
  %1602 = vmatprep.subr.mxu0 0.0
  %1603 = vmatpush2.msra.mxu0 0.0
  %1604 = vmatprep.subr.mxu0 0.0
  %1605 = vmatpush2.msra.mxu0 0.0
  %1606 = vmatprep.subr.mxu0 0.0
  %1607 = vmatpush2.msra.mxu0 0.0
  %1608 = vmatprep.subr.mxu0 0.0
  %1609 = vmatpush2.msra.mxu0 0.0
  %1610 = vmatprep.subr.mxu0 0.0
  %1611 = vmatpush2.msra.mxu0 0.0
  %1612 = vmatprep.mubr.f32.mxu0 0.0
  %1613 = vmatmul.mubr.f32.gmra.mxu0 %v1546
  %v1614 = vpop.f32.mrf.mxu0
  %v1615 = vadd.f32 %v250, %v1614
  %v1616 = vpop.f32.mrf.mxu0
  %1617 = vdwg.mxu0
  %1618 = vst.msk [vmem:[%s7 + $0xe] sm:$0x3] %vm327, %v1615
  // Predicated region
  $region30: #{tpu_custom_call.1} parent=0 // pred_check
    _
  $region31: #{tpu_custom_call.1} parent=0 // pred_check_branch
    %1620 = sbr.rel (0) target = $region33
  $region32: #{tpu_custom_call.1} parent=0 // pred_region
    _
  $region33: #{tpu_custom_call.1} parent=0 // pred_fallthru
    _
  // Predicated region
  $region34: #{tpu_custom_call.1} parent=0 // pred_check
    _
  $region35: #{tpu_custom_call.1} parent=0 // pred_check_branch
    %1622 = sbr.rel (0) target = $region37
  $region36: #{tpu_custom_call.1} parent=0 // pred_region
    _
  $region37: #{tpu_custom_call.1} parent=0 // pred_fallthru
    _

</llo_original>
